<compile_context>
chip_gen: v7x
topology: tpu7x:2x2x1
jax: 0.10.0
libtpu: 0.0.40
codegen_flags: <defaults>
</compile_context>

<pallas_src>
import functools

import jax
import jax.numpy as jnp
from jax.experimental import pallas as pl
from jax.experimental.pallas import tpu as pltpu

IN_C = 30          # module default in_c
N_CLASSES = 75     # module default n_classes
STEM_C = 64        # stem conv output channels
KH = KW = 7
STRIDE = 2
PAD = 3

LANE = 128
SUBLANE = 8
K_RAW = KH * KW * IN_C                                   # 1470
K_PAD = ((K_RAW + LANE - 1) // LANE) * LANE              # 1536  (12 * 128)
N_PAD = LANE                                             # classifier cols 75 -> 128


def _round_up(x, m):
    return ((x + m - 1) // m) * m


# ---------------------------------------------------------------- kernel ----

def _fused_kernel(p_ref, w_ref, cw_ref, cb_ref, o_ref, acc_ref, *, inv_hw):
    """Fused stem conv (im2col matmul) + ReLU + GAP + classifier.

    p_ref  : (B, THW, K_PAD) bf16   im2col patches for this spatial tile
    w_ref  : (K_PAD, STEM_C) bf16   stem conv weight (K zero-padded)
    cw_ref : (STEM_C, N_PAD) f32    classifier weight (cols zero-padded)
    cb_ref : (1, N_PAD)      f32    classifier bias   (zero-padded)
    o_ref  : (B, N_PAD)      f32    logits (valid after the last grid step)
    acc_ref: (B, STEM_C)     f32    running GAP sum across spatial tiles
    """
    b, t, k = p_ref.shape
    j = pl.program_id(0)

    @pl.when(j == 0)
    def _init():
        acc_ref[...] = jnp.zeros_like(acc_ref)

    # Conv as matmul on the MXU: (B*THW, K) x (K, 64) with f32 accumulation.
    p2 = p_ref[...].reshape(b * t, k)
    feats = jnp.dot(p2, w_ref[...], preferred_element_type=jnp.float32)
    feats = jnp.maximum(feats, 0.0)                      # ReLU
    # Partial global-average-pool sum (zero-padded spatial rows contribute 0).
    acc_ref[...] += jnp.sum(feats.reshape(b, t, STEM_C), axis=1)

    @pl.when(j == pl.num_programs(0) - 1)
    def _finalize():
        pooled = acc_ref[...] * inv_hw                   # (B, STEM_C)
        o_ref[...] = (
            jnp.dot(pooled, cw_ref[...], preferred_element_type=jnp.float32)
            + cb_ref[...]
        )


# ------------------------------------------------------------------- glue ---

def _im2col(x_nhwc):
    """[B,H,W,C] -> ([B, Ho*Wo, KH*KW*C], Ho, Wo), feature order (kh, kw, c)."""
    B, H, W, C = x_nhwc.shape
    xp = jnp.pad(x_nhwc, ((0, 0), (PAD, PAD), (PAD, PAD), (0, 0)))
    Ho = (H + 2 * PAD - KH) // STRIDE + 1
    Wo = (W + 2 * PAD - KW) // STRIDE + 1
    cols = []
    for i in range(KH):
        for j in range(KW):
            cols.append(
                xp[:, i:i + Ho * STRIDE:STRIDE, j:j + Wo * STRIDE:STRIDE, :]
            )
    p = jnp.stack(cols, axis=3)                          # [B, Ho, Wo, KH*KW, C]
    return p.reshape(B, Ho * Wo, KH * KW * C), Ho, Wo


def rsna24_forward(x_nchw, params):
    """x_nchw: [B, IN_C, H, W] float32 -> logits [B, N_CLASSES] float32."""
    B = x_nchw.shape[0]
    x_nhwc = jnp.transpose(x_nchw, (0, 2, 3, 1))
    patches, Ho, Wo = _im2col(x_nhwc)                    # [B, HW, K_RAW] f32
    HW = Ho * Wo

    # Spatial tile: multiple of 8 rows, sized so the double-buffered bf16
    # input block stays within ~16 MiB (safe for v7x's 64 MiB VMEM part and
    # comfortably under v5e/v6e scoped budgets).
    in_buf_budget = 16 << 20
    cap = max(SUBLANE,
              (in_buf_budget // (2 * B * K_PAD * 2)) // SUBLANE * SUBLANE)
    thw = min(_round_up(HW, SUBLANE), cap)
    hw_pad = _round_up(HW, thw)
    n_tiles = hw_pad // thw

    # Zero-pad spatial rows (contribute exactly 0 after conv+ReLU, bias-free)
    # and pad K 1470 -> 1536; cast activations to bf16 for halved HBM traffic.
    patches = jnp.pad(patches, ((0, 0), (0, hw_pad - HW), (0, K_PAD - K_RAW)))
    patches = patches.astype(jnp.bfloat16)

    in_block_bytes = B * thw * K_PAD * 2
    vmem_bytes = int(min(max(2 * in_block_bytes + (8 << 20), 32 << 20), 60 << 20))

    kernel = functools.partial(_fused_kernel, inv_hw=1.0 / float(HW))
    logits_pad = pl.pallas_call(
        kernel,
        out_shape=jax.ShapeDtypeStruct((B, N_PAD), jnp.float32),
        grid=(n_tiles,),
        in_specs=[
            pl.BlockSpec((B, thw, K_PAD), lambda j: (0, j, 0)),   # patches tile
            pl.BlockSpec((K_PAD, STEM_C), lambda j: (0, 0)),      # stem weight
            pl.BlockSpec((STEM_C, N_PAD), lambda j: (0, 0)),      # cls weight
            pl.BlockSpec((1, N_PAD), lambda j: (0, 0)),           # cls bias
        ],
        out_specs=pl.BlockSpec((B, N_PAD), lambda j: (0, 0)),
        scratch_shapes=[pltpu.VMEM((B, STEM_C), jnp.float32)],
        compiler_params=pltpu.CompilerParams(
            dimension_semantics=("arbitrary",),   # GAP reduction over HW tiles
            vmem_limit_bytes=vmem_bytes,
        ),
        cost_estimate=pl.CostEstimate(
            flops=2 * B * hw_pad * K_PAD * STEM_C + 2 * B * STEM_C * N_PAD,
            transcendentals=0,
            bytes_accessed=(B * hw_pad * K_PAD * 2        # bf16 patches
                            + K_PAD * STEM_C * 2          # bf16 stem weight
                            + STEM_C * N_PAD * 4          # f32 cls weight
                            + N_PAD * 4 + B * N_PAD * 4), # bias + logits
        ),
    )(patches, params["stem_w"], params["cls_w"], params["cls_b"])

    return logits_pad[:, :N_CLASSES]


def init_params(key):
    """Deterministic synthetic weights matching the module's layer shapes."""
    k1, k2, k3 = jax.random.split(key, 3)
    fan_in = KH * KW * IN_C
    # Conv2d weight in PyTorch layout [out, in, kh, kw], He init.
    w_conv = jax.random.normal(k1, (STEM_C, IN_C, KH, KW), jnp.float32)
    w_conv = w_conv * (2.0 / fan_in) ** 0.5
    # Rearrange to im2col feature order (kh, kw, c) -> [K_RAW, STEM_C], pad K.
    stem_w = jnp.transpose(w_conv, (2, 3, 1, 0)).reshape(K_RAW, STEM_C)
    stem_w = jnp.pad(stem_w, ((0, K_PAD - K_RAW), (0, 0))).astype(jnp.bfloat16)

    cls_w = jax.random.normal(k2, (STEM_C, N_CLASSES), jnp.float32)
    cls_w = cls_w * (1.0 / STEM_C) ** 0.5
    cls_w = jnp.pad(cls_w, ((0, 0), (0, N_PAD - N_CLASSES)))
    cls_b = jax.random.normal(k3, (1, N_CLASSES), jnp.float32) * 0.01
    cls_b = jnp.pad(cls_b, ((0, 0), (0, N_PAD - N_CLASSES)))
    return {"stem_w": stem_w, "cls_w": cls_w, "cls_b": cls_b}


if __name__ == "__main__":
    key = jax.random.PRNGKey(0)
    kx, kp = jax.random.split(key)

    B, H, W = 2, 16, 16
    x = jax.random.normal(kx, (B, IN_C, H, W), jnp.float32)   # NCHW like PyTorch
    params = init_params(kp)

    y = jax.jit(rsna24_forward)(x, params)
    jax.block_until_ready(y)
    assert y.shape == (B, N_CLASSES) and y.dtype == jnp.float32
    print("KERNEL_OK")
</pallas_src>

<mosaic_0001>
module attributes {stable_mosaic.version = 11 : i64} {
  func.func @_fused_kernel(%arg0: i32, %arg1: memref<2x64x1536xbf16, #tpu.memory_space<vmem>>, %arg2: memref<1536x64xbf16, #tpu.memory_space<vmem>>, %arg3: memref<64x128xf32, #tpu.memory_space<vmem>>, %arg4: memref<1x128xf32, #tpu.memory_space<vmem>>, %arg5: memref<2x128xf32, #tpu.memory_space<vmem>>, %arg6: memref<2x64xf32, #tpu.memory_space<vmem>>) attributes {dimension_semantics = [#tpu.dimension_semantics<arbitrary>], iteration_bounds = array<i64: 1>, scalar_prefetch = 0 : i64, scratch_operands = 1 : i64, tpu.core_type = #tpu.core_type<tc>, window_params = [{transform_indices = @transform_0, window_bounds = array<i64: 2, 64, 1536>}, {pipeline_mode = #tpu.pipeline_mode<synchronous>, transform_indices = @transform_1, window_bounds = array<i64: 1536, 64>}, {pipeline_mode = #tpu.pipeline_mode<synchronous>, transform_indices = @transform_2, window_bounds = array<i64: 64, 128>}, {pipeline_mode = #tpu.pipeline_mode<synchronous>, transform_indices = @transform_3, window_bounds = array<i64: 1, 128>}, {pipeline_mode = #tpu.pipeline_mode<synchronous>, transform_indices = @transform_4, window_bounds = array<i64: 2, 128>}]} {
    %c0_i32 = arith.constant 0 : i32
    %0 = arith.cmpi eq, %arg0, %c0_i32 : i32
    %1 = arith.extui %0 : i1 to i32
    %c0_i32_0 = arith.constant 0 : i32
    %2 = arith.cmpi ne, %1, %c0_i32_0 : i32
    scf.if %2 {
      %cst_13 = arith.constant 0.000000e+00 : f32
      %17 = vector.broadcast %cst_13 : f32 to vector<2x64xf32>
      %c0_14 = arith.constant 0 : index
      %c0_15 = arith.constant 0 : index
      %18 = vector.load %arg6[%c0_14, %c0_15] : memref<2x64xf32, #tpu.memory_space<vmem>>, vector<2x64xf32>
      tpu.vector_store %arg6[%c0_14, %c0_15], %17 {strides = array<i32>} : memref<2x64xf32, #tpu.memory_space<vmem>>, vector<2x64xf32>,
    } else {
    }
    %c0 = arith.constant 0 : index
    %c0_1 = arith.constant 0 : index
    %c0_2 = arith.constant 0 : index
    %3 = vector.load %arg1[%c0, %c0_1, %c0_2] : memref<2x64x1536xbf16, #tpu.memory_space<vmem>>, vector<2x64x1536xbf16>
    %4 = vector.shape_cast %3 : vector<2x64x1536xbf16> to vector<128x1536xbf16>
    %c0_3 = arith.constant 0 : index
    %c0_4 = arith.constant 0 : index
    %5 = vector.load %arg2[%c0_3, %c0_4] : memref<1536x64xbf16, #tpu.memory_space<vmem>>, vector<1536x64xbf16>
    %cst = arith.constant dense<0.000000e+00> : vector<128x64xf32>
    %6 = tpu.matmul %4, %5, %cst {dimension_numbers = #tpu.dot_dimension_numbers<[1], [0], [0], [1], [0, 0, 1, 1], [], []>} : vector<128x1536xbf16>, vector<1536x64xbf16>, vector<128x64xf32> -> vector<128x64xf32>
    %cst_5 = arith.constant 0.000000e+00 : f32
    %7 = vector.broadcast %cst_5 : f32 to vector<128x64xf32>
    %8 = arith.maximumf %6, %7 : vector<128x64xf32>
    %c0_6 = arith.constant 0 : index
    %c0_7 = arith.constant 0 : index
    %9 = vector.load %arg6[%c0_6, %c0_7] : memref<2x64xf32, #tpu.memory_space<vmem>>, vector<2x64xf32>
    %10 = vector.shape_cast %8 : vector<128x64xf32> to vector<2x64x64xf32>
    %cst_8 = arith.constant dense<0.000000e+00> : vector<2x64xf32>
    %11 = vector.multi_reduction <add>, %10, %cst_8 [1] : vector<2x64x64xf32> to vector<2x64xf32>
    %12 = arith.addf %9, %11 : vector<2x64xf32>
    %c0_9 = arith.constant 0 : index
    %c0_10 = arith.constant 0 : index
    %13 = vector.load %arg6[%c0_9, %c0_10] : memref<2x64xf32, #tpu.memory_space<vmem>>, vector<2x64xf32>
    tpu.vector_store %arg6[%c0_9, %c0_10], %12 {strides = array<i32>} : memref<2x64xf32, #tpu.memory_space<vmem>>, vector<2x64xf32>,
    %c0_i32_11 = arith.constant 0 : i32
    %14 = arith.cmpi eq, %arg0, %c0_i32_11 : i32
    %15 = arith.extui %14 : i1 to i32
    %c0_i32_12 = arith.constant 0 : i32
    %16 = arith.cmpi ne, %15, %c0_i32_12 : i32
    scf.if %16 {
      %c0_13 = arith.constant 0 : index
      %c0_14 = arith.constant 0 : index
      %17 = vector.load %arg6[%c0_13, %c0_14] : memref<2x64xf32, #tpu.memory_space<vmem>>, vector<2x64xf32>
      %cst_15 = arith.constant 1.562500e-02 : f32
      %18 = vector.broadcast %cst_15 : f32 to vector<2x64xf32>
      %19 = arith.mulf %17, %18 : vector<2x64xf32>
      %c0_16 = arith.constant 0 : index
      %c0_17 = arith.constant 0 : index
      %20 = vector.load %arg3[%c0_16, %c0_17] : memref<64x128xf32, #tpu.memory_space<vmem>>, vector<64x128xf32>
      %cst_18 = arith.constant dense<0.000000e+00> : vector<2x128xf32>
      %21 = tpu.matmul %19, %20, %cst_18 {dimension_numbers = #tpu.dot_dimension_numbers<[1], [0], [0], [1], [0, 0, 1, 1], [], []>} : vector<2x64xf32>, vector<64x128xf32>, vector<2x128xf32> -> vector<2x128xf32>
      %c0_19 = arith.constant 0 : index
      %c0_20 = arith.constant 0 : index
      %22 = vector.load %arg4[%c0_19, %c0_20] : memref<1x128xf32, #tpu.memory_space<vmem>>, vector<1x128xf32>
      %23 = vector.broadcast %22 : vector<1x128xf32> to vector<2x128xf32>
      %24 = arith.addf %21, %23 : vector<2x128xf32>
      %c0_21 = arith.constant 0 : index
      %c0_22 = arith.constant 0 : index
      %25 = vector.load %arg5[%c0_21, %c0_22] : memref<2x128xf32, #tpu.memory_space<vmem>>, vector<2x128xf32>
      tpu.vector_store %arg5[%c0_21, %c0_22], %24 {strides = array<i32>} : memref<2x128xf32, #tpu.memory_space<vmem>>, vector<2x128xf32>,
    } else {
    }
    return
  }
  func.func @transform_0(%arg0: i32) -> (i32, i32, i32) {
    %c0_i32 = arith.constant 0 : i32
    %c0_i32_0 = arith.constant 0 : i32
    %c0_i32_1 = arith.constant 0 : i32
    return %c0_i32, %arg0, %c0_i32_0 : i32, i32, i32
  }
  func.func @transform_1(%arg0: i32) -> (i32, i32) {
    %c0_i32 = arith.constant 0 : i32
    %c0_i32_0 = arith.constant 0 : i32
    %c0_i32_1 = arith.constant 0 : i32
    return %c0_i32, %c0_i32_0 : i32, i32
  }
  func.func @transform_2(%arg0: i32) -> (i32, i32) {
    %c0_i32 = arith.constant 0 : i32
    %c0_i32_0 = arith.constant 0 : i32
    %c0_i32_1 = arith.constant 0 : i32
    return %c0_i32, %c0_i32_0 : i32, i32
  }
  func.func @transform_3(%arg0: i32) -> (i32, i32) {
    %c0_i32 = arith.constant 0 : i32
    %c0_i32_0 = arith.constant 0 : i32
    %c0_i32_1 = arith.constant 0 : i32
    return %c0_i32, %c0_i32_0 : i32, i32
  }
  func.func @transform_4(%arg0: i32) -> (i32, i32) {
    %c0_i32 = arith.constant 0 : i32
    %c0_i32_0 = arith.constant 0 : i32
    %c0_i32_1 = arith.constant 0 : i32
    return %c0_i32, %c0_i32_0 : i32, i32
  }
}

</mosaic_0001>

<llo_original>
// kernel: rsna24_forward.1
$region0: #{rsna24_forward.1}
  #allocation0 [shape = 'u32[]', space=smem, size = 0x4, offset = 0x4, fixed_abs, tag = 'smem constant byte address 0x4 - core index']
  #allocation1 [shape = 'u32[144,128]{1,0:T(1,128)}', space=vmem, size = 0x12000, scoped, tag = 'internal scratch']
  #allocation2 [shape = 'f32[2,64]{1,0:T(2,128)}', space=vmem, size = 0x400, scoped, tag = 'scratch operand']
  %s0 = inlined_call_operand.vmem [shape: bf16[2,64,1536], index: 0, kind: input, shape index: {}]
  %s1 = inlined_call_operand.vmem [shape: bf16[1536,64], index: 1, kind: input, shape index: {}]
  %s2 = inlined_call_operand.vmem [shape: f32[64,128], index: 2, kind: input, shape index: {}]
  %s3 = inlined_call_operand.vmem [shape: f32[1,128], index: 3, kind: input, shape index: {}]
  %s4 = inlined_call_operand.hbm [shape: f32[2,128], index: 4, kind: output, shape index: {}]
  %s5 = sld [smem:[#allocation0]]
  $region34: #{rsna24_forward.1} parent=0
    _
  %s7 = ssub.s32 1, %s5
  %s8 = scalar_select 0, %s7, %s5
  $region1: #{rsna24_forward.1} parent=0
    #allocation3 [shape = 'u8[1024]{0}', space=vmem, size = 0x400, scoped, tag = 'output window, operand 0, single buffered']
    #allocation4 [shape = 's32[1]{0}', space=sflag, size = 0x4, scoped, tag = 'scoped memory for rsna24_forward.1']
    %9 = vsyncpa [#allocation4], 0
    // Predicated region
    $region2: #{rsna24_forward.1} parent=1 // pred_check
      _
    $region3: #{rsna24_forward.1} parent=1 // pred_check_branch
      %11 = sbr.rel (0) target = $region5
    $region4: #{rsna24_forward.1} parent=1 // pred_region
      _
    $region5: #{rsna24_forward.1} parent=1 // pred_fallthru
      _
    // Predicated region
    $region6: #{rsna24_forward.1} parent=1 // pred_check
      _
    $region7: #{rsna24_forward.1} parent=1 // pred_check_branch
      %13 = sbr.rel (0) target = $region9
    $region8: #{rsna24_forward.1} parent=1 // pred_region
      _
    $region9: #{rsna24_forward.1} parent=1 // pred_fallthru
      _
    // Predicated region
    $region10: #{rsna24_forward.1} parent=1 // pred_check
      _
    $region11: #{rsna24_forward.1} parent=1 // pred_check_branch
      %15 = sbr.rel (0) target = $region13
    $region12: #{rsna24_forward.1} parent=1 // pred_region
      _
    $region13: #{rsna24_forward.1} parent=1 // pred_fallthru
      _
    // Predicated region
    $region14: #{rsna24_forward.1} parent=1 // pred_check
      _
    $region15: #{rsna24_forward.1} parent=1 // pred_check_branch
      %17 = sbr.rel (0) target = $region17
    $region16: #{rsna24_forward.1} parent=1 // pred_region
      _
    $region17: #{rsna24_forward.1} parent=1 // pred_fallthru
      _
    %p19 = scmp.eq.s32.totalorder 0, 0
    // Predicated region
    $region18: #{rsna24_forward.1} parent=1 // pred_check
      %p20 = pneg %p19
    $region19: #{rsna24_forward.1} parent=1 // pred_check_branch
      %22 = sbr.rel (%p20) target = $region21
    $region20: #{rsna24_forward.1} parent=1 // pred_region
      %vm23 = vcmask 517120
      %24 = vst.msk [vmem:[#allocation2] sm:$0x3] %vm23, 0.0
    $region21: #{rsna24_forward.1} parent=1 // pred_fallthru
      _
    %v25 = vld [vmem:[%s0] sm:$0xff]
    %v26 = vld [vmem:[%s0 + $0x8] sm:$0xff]
    %v27 = vld [vmem:[%s0 + $0x10] sm:$0xff]
    %v28 = vld [vmem:[%s0 + $0x18] sm:$0xff]
    %v29 = vld [vmem:[%s0 + $0x20] sm:$0xff]
    %v30 = vld [vmem:[%s0 + $0x28] sm:$0xff]
    %v31 = vld [vmem:[%s0 + $0x30] sm:$0xff]
    %v32 = vld [vmem:[%s0 + $0x38] sm:$0xff]
    %v33 = vld [vmem:[%s0 + $0x40] sm:$0xff]
    %v34 = vld [vmem:[%s0 + $0x48] sm:$0xff]
    %v35 = vld [vmem:[%s0 + $0x50] sm:$0xff]
    %v36 = vld [vmem:[%s0 + $0x58] sm:$0xff]
    %v37 = vld [vmem:[%s0 + $0x60] sm:$0xff]
    %v38 = vld [vmem:[%s0 + $0x68] sm:$0xff]
    %v39 = vld [vmem:[%s0 + $0x70] sm:$0xff]
    %v40 = vld [vmem:[%s0 + $0x78] sm:$0xff]
    %v41 = vld [vmem:[%s0 + $0x80] sm:$0xff]
    %v42 = vld [vmem:[%s0 + $0x88] sm:$0xff]
    %v43 = vld [vmem:[%s0 + $0x90] sm:$0xff]
    %v44 = vld [vmem:[%s0 + $0x98] sm:$0xff]
    %v45 = vld [vmem:[%s0 + $0xa0] sm:$0xff]
    %v46 = vld [vmem:[%s0 + $0xa8] sm:$0xff]
    %v47 = vld [vmem:[%s0 + $0xb0] sm:$0xff]
    %v48 = vld [vmem:[%s0 + $0xb8] sm:$0xff]
    %v49 = vld [vmem:[%s0 + $0xc0] sm:$0xff]
    %v50 = vld [vmem:[%s0 + $0xc8] sm:$0xff]
    %v51 = vld [vmem:[%s0 + $0xd0] sm:$0xff]
    %v52 = vld [vmem:[%s0 + $0xd8] sm:$0xff]
    %v53 = vld [vmem:[%s0 + $0xe0] sm:$0xff]
    %v54 = vld [vmem:[%s0 + $0xe8] sm:$0xff]
    %v55 = vld [vmem:[%s0 + $0xf0] sm:$0xff]
    %v56 = vld [vmem:[%s0 + $0xf8] sm:$0xff]
    %v57 = vld [vmem:[%s0 + $0x100] sm:$0xff]
    %v58 = vld [vmem:[%s0 + $0x108] sm:$0xff]
    %v59 = vld [vmem:[%s0 + $0x110] sm:$0xff]
    %v60 = vld [vmem:[%s0 + $0x118] sm:$0xff]
    %v61 = vld [vmem:[%s0 + $0x120] sm:$0xff]
    %v62 = vld [vmem:[%s0 + $0x128] sm:$0xff]
    %v63 = vld [vmem:[%s0 + $0x130] sm:$0xff]
    %v64 = vld [vmem:[%s0 + $0x138] sm:$0xff]
    %v65 = vld [vmem:[%s0 + $0x140] sm:$0xff]
    %v66 = vld [vmem:[%s0 + $0x148] sm:$0xff]
    %v67 = vld [vmem:[%s0 + $0x150] sm:$0xff]
    %v68 = vld [vmem:[%s0 + $0x158] sm:$0xff]
    %v69 = vld [vmem:[%s0 + $0x160] sm:$0xff]
    %v70 = vld [vmem:[%s0 + $0x168] sm:$0xff]
    %v71 = vld [vmem:[%s0 + $0x170] sm:$0xff]
    %v72 = vld [vmem:[%s0 + $0x178] sm:$0xff]
    %v73 = vld [vmem:[%s0 + $0x180] sm:$0xff]
    %v74 = vld [vmem:[%s0 + $0x188] sm:$0xff]
    %v75 = vld [vmem:[%s0 + $0x190] sm:$0xff]
    %v76 = vld [vmem:[%s0 + $0x198] sm:$0xff]
    %v77 = vld [vmem:[%s0 + $0x1a0] sm:$0xff]
    %v78 = vld [vmem:[%s0 + $0x1a8] sm:$0xff]
    %v79 = vld [vmem:[%s0 + $0x1b0] sm:$0xff]
    %v80 = vld [vmem:[%s0 + $0x1b8] sm:$0xff]
    %v81 = vld [vmem:[%s0 + $0x1c0] sm:$0xff]
    %v82 = vld [vmem:[%s0 + $0x1c8] sm:$0xff]
    %v83 = vld [vmem:[%s0 + $0x1d0] sm:$0xff]
    %v84 = vld [vmem:[%s0 + $0x1d8] sm:$0xff]
    %v85 = vld [vmem:[%s0 + $0x1e0] sm:$0xff]
    %v86 = vld [vmem:[%s0 + $0x1e8] sm:$0xff]
    %v87 = vld [vmem:[%s0 + $0x1f0] sm:$0xff]
    %v88 = vld [vmem:[%s0 + $0x1f8] sm:$0xff]
    %v89 = vld [vmem:[%s0 + $0x200] sm:$0xff]
    %v90 = vld [vmem:[%s0 + $0x208] sm:$0xff]
    %v91 = vld [vmem:[%s0 + $0x210] sm:$0xff]
    %v92 = vld [vmem:[%s0 + $0x218] sm:$0xff]
    %v93 = vld [vmem:[%s0 + $0x220] sm:$0xff]
    %v94 = vld [vmem:[%s0 + $0x228] sm:$0xff]
    %v95 = vld [vmem:[%s0 + $0x230] sm:$0xff]
    %v96 = vld [vmem:[%s0 + $0x238] sm:$0xff]
    %v97 = vld [vmem:[%s0 + $0x240] sm:$0xff]
    %v98 = vld [vmem:[%s0 + $0x248] sm:$0xff]
    %v99 = vld [vmem:[%s0 + $0x250] sm:$0xff]
    %v100 = vld [vmem:[%s0 + $0x258] sm:$0xff]
    %v101 = vld [vmem:[%s0 + $0x260] sm:$0xff]
    %v102 = vld [vmem:[%s0 + $0x268] sm:$0xff]
    %v103 = vld [vmem:[%s0 + $0x270] sm:$0xff]
    %v104 = vld [vmem:[%s0 + $0x278] sm:$0xff]
    %v105 = vld [vmem:[%s0 + $0x280] sm:$0xff]
    %v106 = vld [vmem:[%s0 + $0x288] sm:$0xff]
    %v107 = vld [vmem:[%s0 + $0x290] sm:$0xff]
    %v108 = vld [vmem:[%s0 + $0x298] sm:$0xff]
    %v109 = vld [vmem:[%s0 + $0x2a0] sm:$0xff]
    %v110 = vld [vmem:[%s0 + $0x2a8] sm:$0xff]
    %v111 = vld [vmem:[%s0 + $0x2b0] sm:$0xff]
    %v112 = vld [vmem:[%s0 + $0x2b8] sm:$0xff]
    %v113 = vld [vmem:[%s0 + $0x2c0] sm:$0xff]
    %v114 = vld [vmem:[%s0 + $0x2c8] sm:$0xff]
    %v115 = vld [vmem:[%s0 + $0x2d0] sm:$0xff]
    %v116 = vld [vmem:[%s0 + $0x2d8] sm:$0xff]
    %v117 = vld [vmem:[%s0 + $0x2e0] sm:$0xff]
    %v118 = vld [vmem:[%s0 + $0x2e8] sm:$0xff]
    %v119 = vld [vmem:[%s0 + $0x2f0] sm:$0xff]
    %v120 = vld [vmem:[%s0 + $0x2f8] sm:$0xff]
    %v121 = vld [vmem:[%s1] sm:$0xf]
    %v122 = vld [vmem:[%s1 + $0x4] sm:$0xf]
    %v123 = vld [vmem:[%s1 + $0x8] sm:$0xf]
    %v124 = vld [vmem:[%s1 + $0xc] sm:$0xf]
    %v125 = vld [vmem:[%s1 + $0x10] sm:$0xf]
    %v126 = vld [vmem:[%s1 + $0x14] sm:$0xf]
    %v127 = vld [vmem:[%s1 + $0x18] sm:$0xf]
    %v128 = vld [vmem:[%s1 + $0x1c] sm:$0xf]
    %v129 = vld [vmem:[%s1 + $0x20] sm:$0xf]
    %v130 = vld [vmem:[%s1 + $0x24] sm:$0xf]
    %v131 = vld [vmem:[%s1 + $0x28] sm:$0xf]
    %v132 = vld [vmem:[%s1 + $0x2c] sm:$0xf]
    %v133 = vld [vmem:[%s1 + $0x30] sm:$0xf]
    %v134 = vld [vmem:[%s1 + $0x34] sm:$0xf]
    %v135 = vld [vmem:[%s1 + $0x38] sm:$0xf]
    %v136 = vld [vmem:[%s1 + $0x3c] sm:$0xf]
    %v137 = vld [vmem:[%s1 + $0x40] sm:$0xf]
    %v138 = vld [vmem:[%s1 + $0x44] sm:$0xf]
    %v139 = vld [vmem:[%s1 + $0x48] sm:$0xf]
    %v140 = vld [vmem:[%s1 + $0x4c] sm:$0xf]
    %v141 = vld [vmem:[%s1 + $0x50] sm:$0xf]
    %v142 = vld [vmem:[%s1 + $0x54] sm:$0xf]
    %v143 = vld [vmem:[%s1 + $0x58] sm:$0xf]
    %v144 = vld [vmem:[%s1 + $0x5c] sm:$0xf]
    %v145 = vld [vmem:[%s1 + $0x60] sm:$0xf]
    %v146 = vld [vmem:[%s1 + $0x64] sm:$0xf]
    %v147 = vld [vmem:[%s1 + $0x68] sm:$0xf]
    %v148 = vld [vmem:[%s1 + $0x6c] sm:$0xf]
    %v149 = vld [vmem:[%s1 + $0x70] sm:$0xf]
    %v150 = vld [vmem:[%s1 + $0x74] sm:$0xf]
    %v151 = vld [vmem:[%s1 + $0x78] sm:$0xf]
    %v152 = vld [vmem:[%s1 + $0x7c] sm:$0xf]
    %v153 = vld [vmem:[%s1 + $0x80] sm:$0xf]
    %v154 = vld [vmem:[%s1 + $0x84] sm:$0xf]
    %v155 = vld [vmem:[%s1 + $0x88] sm:$0xf]
    %v156 = vld [vmem:[%s1 + $0x8c] sm:$0xf]
    %v157 = vld [vmem:[%s1 + $0x90] sm:$0xf]
    %v158 = vld [vmem:[%s1 + $0x94] sm:$0xf]
    %v159 = vld [vmem:[%s1 + $0x98] sm:$0xf]
    %v160 = vld [vmem:[%s1 + $0x9c] sm:$0xf]
    %v161 = vld [vmem:[%s1 + $0xa0] sm:$0xf]
    %v162 = vld [vmem:[%s1 + $0xa4] sm:$0xf]
    %v163 = vld [vmem:[%s1 + $0xa8] sm:$0xf]
    %v164 = vld [vmem:[%s1 + $0xac] sm:$0xf]
    %v165 = vld [vmem:[%s1 + $0xb0] sm:$0xf]
    %v166 = vld [vmem:[%s1 + $0xb4] sm:$0xf]
    %v167 = vld [vmem:[%s1 + $0xb8] sm:$0xf]
    %v168 = vld [vmem:[%s1 + $0xbc] sm:$0xf]
    %v169 = vld [vmem:[%s1 + $0xc0] sm:$0xf]
    %v170 = vld [vmem:[%s1 + $0xc4] sm:$0xf]
    %v171 = vld [vmem:[%s1 + $0xc8] sm:$0xf]
    %v172 = vld [vmem:[%s1 + $0xcc] sm:$0xf]
    %v173 = vld [vmem:[%s1 + $0xd0] sm:$0xf]
    %v174 = vld [vmem:[%s1 + $0xd4] sm:$0xf]
    %v175 = vld [vmem:[%s1 + $0xd8] sm:$0xf]
    %v176 = vld [vmem:[%s1 + $0xdc] sm:$0xf]
    %v177 = vld [vmem:[%s1 + $0xe0] sm:$0xf]
    %v178 = vld [vmem:[%s1 + $0xe4] sm:$0xf]
    %v179 = vld [vmem:[%s1 + $0xe8] sm:$0xf]
    %v180 = vld [vmem:[%s1 + $0xec] sm:$0xf]
    %v181 = vld [vmem:[%s1 + $0xf0] sm:$0xf]
    %v182 = vld [vmem:[%s1 + $0xf4] sm:$0xf]
    %v183 = vld [vmem:[%s1 + $0xf8] sm:$0xf]
    %v184 = vld [vmem:[%s1 + $0xfc] sm:$0xf]
    %v185 = vld [vmem:[%s1 + $0x100] sm:$0xf]
    %v186 = vld [vmem:[%s1 + $0x104] sm:$0xf]
    %v187 = vld [vmem:[%s1 + $0x108] sm:$0xf]
    %v188 = vld [vmem:[%s1 + $0x10c] sm:$0xf]
    %v189 = vld [vmem:[%s1 + $0x110] sm:$0xf]
    %v190 = vld [vmem:[%s1 + $0x114] sm:$0xf]
    %v191 = vld [vmem:[%s1 + $0x118] sm:$0xf]
    %v192 = vld [vmem:[%s1 + $0x11c] sm:$0xf]
    %v193 = vld [vmem:[%s1 + $0x120] sm:$0xf]
    %v194 = vld [vmem:[%s1 + $0x124] sm:$0xf]
    %v195 = vld [vmem:[%s1 + $0x128] sm:$0xf]
    %v196 = vld [vmem:[%s1 + $0x12c] sm:$0xf]
    %v197 = vld [vmem:[%s1 + $0x130] sm:$0xf]
    %v198 = vld [vmem:[%s1 + $0x134] sm:$0xf]
    %v199 = vld [vmem:[%s1 + $0x138] sm:$0xf]
    %v200 = vld [vmem:[%s1 + $0x13c] sm:$0xf]
    %v201 = vld [vmem:[%s1 + $0x140] sm:$0xf]
    %v202 = vld [vmem:[%s1 + $0x144] sm:$0xf]
    %v203 = vld [vmem:[%s1 + $0x148] sm:$0xf]
    %v204 = vld [vmem:[%s1 + $0x14c] sm:$0xf]
    %v205 = vld [vmem:[%s1 + $0x150] sm:$0xf]
    %v206 = vld [vmem:[%s1 + $0x154] sm:$0xf]
    %v207 = vld [vmem:[%s1 + $0x158] sm:$0xf]
    %v208 = vld [vmem:[%s1 + $0x15c] sm:$0xf]
    %v209 = vld [vmem:[%s1 + $0x160] sm:$0xf]
    %v210 = vld [vmem:[%s1 + $0x164] sm:$0xf]
    %v211 = vld [vmem:[%s1 + $0x168] sm:$0xf]
    %v212 = vld [vmem:[%s1 + $0x16c] sm:$0xf]
    %v213 = vld [vmem:[%s1 + $0x170] sm:$0xf]
    %v214 = vld [vmem:[%s1 + $0x174] sm:$0xf]
    %v215 = vld [vmem:[%s1 + $0x178] sm:$0xf]
    %v216 = vld [vmem:[%s1 + $0x17c] sm:$0xf]
    %v217 = vld [vmem:[%s1 + $0x180] sm:$0xf]
    %v218 = vld [vmem:[%s1 + $0x184] sm:$0xf]
    %v219 = vld [vmem:[%s1 + $0x188] sm:$0xf]
    %v220 = vld [vmem:[%s1 + $0x18c] sm:$0xf]
    %v221 = vld [vmem:[%s1 + $0x190] sm:$0xf]
    %v222 = vld [vmem:[%s1 + $0x194] sm:$0xf]
    %v223 = vld [vmem:[%s1 + $0x198] sm:$0xf]
    %v224 = vld [vmem:[%s1 + $0x19c] sm:$0xf]
    %v225 = vld [vmem:[%s1 + $0x1a0] sm:$0xf]
    %v226 = vld [vmem:[%s1 + $0x1a4] sm:$0xf]
    %v227 = vld [vmem:[%s1 + $0x1a8] sm:$0xf]
    %v228 = vld [vmem:[%s1 + $0x1ac] sm:$0xf]
    %v229 = vld [vmem:[%s1 + $0x1b0] sm:$0xf]
    %v230 = vld [vmem:[%s1 + $0x1b4] sm:$0xf]
    %v231 = vld [vmem:[%s1 + $0x1b8] sm:$0xf]
    %v232 = vld [vmem:[%s1 + $0x1bc] sm:$0xf]
    %v233 = vld [vmem:[%s1 + $0x1c0] sm:$0xf]
    %v234 = vld [vmem:[%s1 + $0x1c4] sm:$0xf]
    %v235 = vld [vmem:[%s1 + $0x1c8] sm:$0xf]
    %v236 = vld [vmem:[%s1 + $0x1cc] sm:$0xf]
    %v237 = vld [vmem:[%s1 + $0x1d0] sm:$0xf]
    %v238 = vld [vmem:[%s1 + $0x1d4] sm:$0xf]
    %v239 = vld [vmem:[%s1 + $0x1d8] sm:$0xf]
    %v240 = vld [vmem:[%s1 + $0x1dc] sm:$0xf]
    %v241 = vld [vmem:[%s1 + $0x1e0] sm:$0xf]
    %v242 = vld [vmem:[%s1 + $0x1e4] sm:$0xf]
    %v243 = vld [vmem:[%s1 + $0x1e8] sm:$0xf]
    %v244 = vld [vmem:[%s1 + $0x1ec] sm:$0xf]
    %v245 = vld [vmem:[%s1 + $0x1f0] sm:$0xf]
    %v246 = vld [vmem:[%s1 + $0x1f4] sm:$0xf]
    %v247 = vld [vmem:[%s1 + $0x1f8] sm:$0xf]
    %v248 = vld [vmem:[%s1 + $0x1fc] sm:$0xf]
    %v249 = vld [vmem:[%s1 + $0x200] sm:$0xf]
    %v250 = vld [vmem:[%s1 + $0x204] sm:$0xf]
    %v251 = vld [vmem:[%s1 + $0x208] sm:$0xf]
    %v252 = vld [vmem:[%s1 + $0x20c] sm:$0xf]
    %v253 = vld [vmem:[%s1 + $0x210] sm:$0xf]
    %v254 = vld [vmem:[%s1 + $0x214] sm:$0xf]
    %v255 = vld [vmem:[%s1 + $0x218] sm:$0xf]
    %v256 = vld [vmem:[%s1 + $0x21c] sm:$0xf]
    %v257 = vld [vmem:[%s1 + $0x220] sm:$0xf]
    %v258 = vld [vmem:[%s1 + $0x224] sm:$0xf]
    %v259 = vld [vmem:[%s1 + $0x228] sm:$0xf]
    %v260 = vld [vmem:[%s1 + $0x22c] sm:$0xf]
    %v261 = vld [vmem:[%s1 + $0x230] sm:$0xf]
    %v262 = vld [vmem:[%s1 + $0x234] sm:$0xf]
    %v263 = vld [vmem:[%s1 + $0x238] sm:$0xf]
    %v264 = vld [vmem:[%s1 + $0x23c] sm:$0xf]
    %v265 = vld [vmem:[%s1 + $0x240] sm:$0xf]
    %v266 = vld [vmem:[%s1 + $0x244] sm:$0xf]
    %v267 = vld [vmem:[%s1 + $0x248] sm:$0xf]
    %v268 = vld [vmem:[%s1 + $0x24c] sm:$0xf]
    %v269 = vld [vmem:[%s1 + $0x250] sm:$0xf]
    %v270 = vld [vmem:[%s1 + $0x254] sm:$0xf]
    %v271 = vld [vmem:[%s1 + $0x258] sm:$0xf]
    %v272 = vld [vmem:[%s1 + $0x25c] sm:$0xf]
    %v273 = vld [vmem:[%s1 + $0x260] sm:$0xf]
    %v274 = vld [vmem:[%s1 + $0x264] sm:$0xf]
    %v275 = vld [vmem:[%s1 + $0x268] sm:$0xf]
    %v276 = vld [vmem:[%s1 + $0x26c] sm:$0xf]
    %v277 = vld [vmem:[%s1 + $0x270] sm:$0xf]
    %v278 = vld [vmem:[%s1 + $0x274] sm:$0xf]
    %v279 = vld [vmem:[%s1 + $0x278] sm:$0xf]
    %v280 = vld [vmem:[%s1 + $0x27c] sm:$0xf]
    %v281 = vld [vmem:[%s1 + $0x280] sm:$0xf]
    %v282 = vld [vmem:[%s1 + $0x284] sm:$0xf]
    %v283 = vld [vmem:[%s1 + $0x288] sm:$0xf]
    %v284 = vld [vmem:[%s1 + $0x28c] sm:$0xf]
    %v285 = vld [vmem:[%s1 + $0x290] sm:$0xf]
    %v286 = vld [vmem:[%s1 + $0x294] sm:$0xf]
    %v287 = vld [vmem:[%s1 + $0x298] sm:$0xf]
    %v288 = vld [vmem:[%s1 + $0x29c] sm:$0xf]
    %v289 = vld [vmem:[%s1 + $0x2a0] sm:$0xf]
    %v290 = vld [vmem:[%s1 + $0x2a4] sm:$0xf]
    %v291 = vld [vmem:[%s1 + $0x2a8] sm:$0xf]
    %v292 = vld [vmem:[%s1 + $0x2ac] sm:$0xf]
    %v293 = vld [vmem:[%s1 + $0x2b0] sm:$0xf]
    %v294 = vld [vmem:[%s1 + $0x2b4] sm:$0xf]
    %v295 = vld [vmem:[%s1 + $0x2b8] sm:$0xf]
    %v296 = vld [vmem:[%s1 + $0x2bc] sm:$0xf]
    %v297 = vld [vmem:[%s1 + $0x2c0] sm:$0xf]
    %v298 = vld [vmem:[%s1 + $0x2c4] sm:$0xf]
    %v299 = vld [vmem:[%s1 + $0x2c8] sm:$0xf]
    %v300 = vld [vmem:[%s1 + $0x2cc] sm:$0xf]
    %v301 = vld [vmem:[%s1 + $0x2d0] sm:$0xf]
    %v302 = vld [vmem:[%s1 + $0x2d4] sm:$0xf]
    %v303 = vld [vmem:[%s1 + $0x2d8] sm:$0xf]
    %v304 = vld [vmem:[%s1 + $0x2dc] sm:$0xf]
    %v305 = vld [vmem:[%s1 + $0x2e0] sm:$0xf]
    %v306 = vld [vmem:[%s1 + $0x2e4] sm:$0xf]
    %v307 = vld [vmem:[%s1 + $0x2e8] sm:$0xf]
    %v308 = vld [vmem:[%s1 + $0x2ec] sm:$0xf]
    %v309 = vld [vmem:[%s1 + $0x2f0] sm:$0xf]
    %v310 = vld [vmem:[%s1 + $0x2f4] sm:$0xf]
    %v311 = vld [vmem:[%s1 + $0x2f8] sm:$0xf]
    %v312 = vld [vmem:[%s1 + $0x2fc] sm:$0xf]
    %v409 = vunpack.c.l.b16 %v25
    %v410 = vunpack.c.h.b16 %v25
    %v411 = vunpack.c.l.b16 %v26
    %v412 = vunpack.c.h.b16 %v26
    %v413 = vunpack.c.l.b16 %v27
    %v414 = vunpack.c.h.b16 %v27
    %v415 = vunpack.c.l.b16 %v28
    %v416 = vunpack.c.h.b16 %v28
    %v417 = vunpack.c.l.b16 %v29
    %v418 = vunpack.c.h.b16 %v29
    %v419 = vunpack.c.l.b16 %v30
    %v420 = vunpack.c.h.b16 %v30
    %v421 = vunpack.c.l.b16 %v31
    %v422 = vunpack.c.h.b16 %v31
    %v423 = vunpack.c.l.b16 %v32
    %v424 = vunpack.c.h.b16 %v32
    %v425 = vunpack.c.l.b16 %v33
    %v426 = vunpack.c.h.b16 %v33
    %v427 = vunpack.c.l.b16 %v34
    %v428 = vunpack.c.h.b16 %v34
    %v429 = vunpack.c.l.b16 %v35
    %v430 = vunpack.c.h.b16 %v35
    %v431 = vunpack.c.l.b16 %v36
    %v432 = vunpack.c.h.b16 %v36
    %v433 = vunpack.c.l.b16 %v37
    %v434 = vunpack.c.h.b16 %v37
    %v435 = vunpack.c.l.b16 %v38
    %v436 = vunpack.c.h.b16 %v38
    %v437 = vunpack.c.l.b16 %v39
    %v438 = vunpack.c.h.b16 %v39
    %v439 = vunpack.c.l.b16 %v40
    %v440 = vunpack.c.h.b16 %v40
    %v441 = vunpack.c.l.b16 %v41
    %v442 = vunpack.c.h.b16 %v41
    %v443 = vunpack.c.l.b16 %v42
    %v444 = vunpack.c.h.b16 %v42
    %v445 = vunpack.c.l.b16 %v43
    %v446 = vunpack.c.h.b16 %v43
    %v447 = vunpack.c.l.b16 %v44
    %v448 = vunpack.c.h.b16 %v44
    %v449 = vunpack.c.l.b16 %v45
    %v450 = vunpack.c.h.b16 %v45
    %v451 = vunpack.c.l.b16 %v46
    %v452 = vunpack.c.h.b16 %v46
    %v453 = vunpack.c.l.b16 %v47
    %v454 = vunpack.c.h.b16 %v47
    %v455 = vunpack.c.l.b16 %v48
    %v456 = vunpack.c.h.b16 %v48
    %v457 = vunpack.c.l.b16 %v49
    %v458 = vunpack.c.h.b16 %v49
    %v459 = vunpack.c.l.b16 %v50
    %v460 = vunpack.c.h.b16 %v50
    %v461 = vunpack.c.l.b16 %v51
    %v462 = vunpack.c.h.b16 %v51
    %v463 = vunpack.c.l.b16 %v52
    %v464 = vunpack.c.h.b16 %v52
    %v465 = vunpack.c.l.b16 %v53
    %v466 = vunpack.c.h.b16 %v53
    %v467 = vunpack.c.l.b16 %v54
    %v468 = vunpack.c.h.b16 %v54
    %v469 = vunpack.c.l.b16 %v55
    %v470 = vunpack.c.h.b16 %v55
    %v471 = vunpack.c.l.b16 %v56
    %v472 = vunpack.c.h.b16 %v56
    %v473 = vunpack.c.l.b16 %v57
    %v474 = vunpack.c.h.b16 %v57
    %v475 = vunpack.c.l.b16 %v58
    %v476 = vunpack.c.h.b16 %v58
    %v477 = vunpack.c.l.b16 %v59
    %v478 = vunpack.c.h.b16 %v59
    %v479 = vunpack.c.l.b16 %v60
    %v480 = vunpack.c.h.b16 %v60
    %v481 = vunpack.c.l.b16 %v61
    %v482 = vunpack.c.h.b16 %v61
    %v483 = vunpack.c.l.b16 %v62
    %v484 = vunpack.c.h.b16 %v62
    %v485 = vunpack.c.l.b16 %v63
    %v486 = vunpack.c.h.b16 %v63
    %v487 = vunpack.c.l.b16 %v64
    %v488 = vunpack.c.h.b16 %v64
    %v489 = vunpack.c.l.b16 %v65
    %v490 = vunpack.c.h.b16 %v65
    %v491 = vunpack.c.l.b16 %v66
    %v492 = vunpack.c.h.b16 %v66
    %v493 = vunpack.c.l.b16 %v67
    %v494 = vunpack.c.h.b16 %v67
    %v495 = vunpack.c.l.b16 %v68
    %v496 = vunpack.c.h.b16 %v68
    %v497 = vunpack.c.l.b16 %v69
    %v498 = vunpack.c.h.b16 %v69
    %v499 = vunpack.c.l.b16 %v70
    %v500 = vunpack.c.h.b16 %v70
    %v501 = vunpack.c.l.b16 %v71
    %v502 = vunpack.c.h.b16 %v71
    %v503 = vunpack.c.l.b16 %v72
    %v504 = vunpack.c.h.b16 %v72
    %v505 = vunpack.c.l.b16 %v73
    %v506 = vunpack.c.h.b16 %v73
    %v507 = vunpack.c.l.b16 %v74
    %v508 = vunpack.c.h.b16 %v74
    %v509 = vunpack.c.l.b16 %v75
    %v510 = vunpack.c.h.b16 %v75
    %v511 = vunpack.c.l.b16 %v76
    %v512 = vunpack.c.h.b16 %v76
    %v513 = vunpack.c.l.b16 %v77
    %v514 = vunpack.c.h.b16 %v77
    %v515 = vunpack.c.l.b16 %v78
    %v516 = vunpack.c.h.b16 %v78
    %v517 = vunpack.c.l.b16 %v79
    %v518 = vunpack.c.h.b16 %v79
    %v519 = vunpack.c.l.b16 %v80
    %v520 = vunpack.c.h.b16 %v80
    %v521 = vunpack.c.l.b16 %v81
    %v522 = vunpack.c.h.b16 %v81
    %v523 = vunpack.c.l.b16 %v82
    %v524 = vunpack.c.h.b16 %v82
    %v525 = vunpack.c.l.b16 %v83
    %v526 = vunpack.c.h.b16 %v83
    %v527 = vunpack.c.l.b16 %v84
    %v528 = vunpack.c.h.b16 %v84
    %v529 = vunpack.c.l.b16 %v85
    %v530 = vunpack.c.h.b16 %v85
    %v531 = vunpack.c.l.b16 %v86
    %v532 = vunpack.c.h.b16 %v86
    %v533 = vunpack.c.l.b16 %v87
    %v534 = vunpack.c.h.b16 %v87
    %v535 = vunpack.c.l.b16 %v88
    %v536 = vunpack.c.h.b16 %v88
    %v537 = vunpack.c.l.b16 %v89
    %v538 = vunpack.c.h.b16 %v89
    %v539 = vunpack.c.l.b16 %v90
    %v540 = vunpack.c.h.b16 %v90
    %v541 = vunpack.c.l.b16 %v91
    %v542 = vunpack.c.h.b16 %v91
    %v543 = vunpack.c.l.b16 %v92
    %v544 = vunpack.c.h.b16 %v92
    %v545 = vunpack.c.l.b16 %v93
    %v546 = vunpack.c.h.b16 %v93
    %v547 = vunpack.c.l.b16 %v94
    %v548 = vunpack.c.h.b16 %v94
    %v549 = vunpack.c.l.b16 %v95
    %v550 = vunpack.c.h.b16 %v95
    %v551 = vunpack.c.l.b16 %v96
    %v552 = vunpack.c.h.b16 %v96
    %v553 = vunpack.c.l.b16 %v97
    %v554 = vunpack.c.h.b16 %v97
    %v555 = vunpack.c.l.b16 %v98
    %v556 = vunpack.c.h.b16 %v98
    %v557 = vunpack.c.l.b16 %v99
    %v558 = vunpack.c.h.b16 %v99
    %v559 = vunpack.c.l.b16 %v100
    %v560 = vunpack.c.h.b16 %v100
    %v561 = vunpack.c.l.b16 %v101
    %v562 = vunpack.c.h.b16 %v101
    %v563 = vunpack.c.l.b16 %v102
    %v564 = vunpack.c.h.b16 %v102
    %v565 = vunpack.c.l.b16 %v103
    %v566 = vunpack.c.h.b16 %v103
    %v567 = vunpack.c.l.b16 %v104
    %v568 = vunpack.c.h.b16 %v104
    %v569 = vunpack.c.l.b16 %v105
    %v570 = vunpack.c.h.b16 %v105
    %v571 = vunpack.c.l.b16 %v106
    %v572 = vunpack.c.h.b16 %v106
    %v573 = vunpack.c.l.b16 %v107
    %v574 = vunpack.c.h.b16 %v107
    %v575 = vunpack.c.l.b16 %v108
    %v576 = vunpack.c.h.b16 %v108
    %v577 = vunpack.c.l.b16 %v109
    %v578 = vunpack.c.h.b16 %v109
    %v579 = vunpack.c.l.b16 %v110
    %v580 = vunpack.c.h.b16 %v110
    %v581 = vunpack.c.l.b16 %v111
    %v582 = vunpack.c.h.b16 %v111
    %v583 = vunpack.c.l.b16 %v112
    %v584 = vunpack.c.h.b16 %v112
    %v585 = vunpack.c.l.b16 %v113
    %v586 = vunpack.c.h.b16 %v113
    %v587 = vunpack.c.l.b16 %v114
    %v588 = vunpack.c.h.b16 %v114
    %v589 = vunpack.c.l.b16 %v115
    %v590 = vunpack.c.h.b16 %v115
    %v591 = vunpack.c.l.b16 %v116
    %v592 = vunpack.c.h.b16 %v116
    %v593 = vunpack.c.l.b16 %v117
    %v594 = vunpack.c.h.b16 %v117
    %v595 = vunpack.c.l.b16 %v118
    %v596 = vunpack.c.h.b16 %v118
    %v597 = vunpack.c.l.b16 %v119
    %v598 = vunpack.c.h.b16 %v119
    %v599 = vunpack.c.l.b16 %v120
    %v600 = vunpack.c.h.b16 %v120
    %v601 = vpack.c.b16 %v421, %v409
    %v602 = vpack.c.b16 %v422, %v410
    %v603 = vpack.c.b16 %v423, %v411
    %v604 = vpack.c.b16 %v424, %v412
    %v605 = vpack.c.b16 %v425, %v413
    %v606 = vpack.c.b16 %v426, %v414
    %v607 = vpack.c.b16 %v427, %v415
    %v608 = vpack.c.b16 %v428, %v416
    %v609 = vpack.c.b16 %v429, %v417
    %v610 = vpack.c.b16 %v430, %v418
    %v611 = vpack.c.b16 %v431, %v419
    %v612 = vpack.c.b16 %v432, %v420
    %v613 = vpack.c.b16 %v445, %v433
    %v614 = vpack.c.b16 %v446, %v434
    %v615 = vpack.c.b16 %v447, %v435
    %v616 = vpack.c.b16 %v448, %v436
    %v617 = vpack.c.b16 %v449, %v437
    %v618 = vpack.c.b16 %v450, %v438
    %v619 = vpack.c.b16 %v451, %v439
    %v620 = vpack.c.b16 %v452, %v440
    %v621 = vpack.c.b16 %v453, %v441
    %v622 = vpack.c.b16 %v454, %v442
    %v623 = vpack.c.b16 %v455, %v443
    %v624 = vpack.c.b16 %v456, %v444
    %v625 = vpack.c.b16 %v469, %v457
    %v626 = vpack.c.b16 %v470, %v458
    %v627 = vpack.c.b16 %v471, %v459
    %v628 = vpack.c.b16 %v472, %v460
    %v629 = vpack.c.b16 %v473, %v461
    %v630 = vpack.c.b16 %v474, %v462
    %v631 = vpack.c.b16 %v475, %v463
    %v632 = vpack.c.b16 %v476, %v464
    %v633 = vpack.c.b16 %v477, %v465
    %v634 = vpack.c.b16 %v478, %v466
    %v635 = vpack.c.b16 %v479, %v467
    %v636 = vpack.c.b16 %v480, %v468
    %v637 = vpack.c.b16 %v493, %v481
    %v638 = vpack.c.b16 %v494, %v482
    %v639 = vpack.c.b16 %v495, %v483
    %v640 = vpack.c.b16 %v496, %v484
    %v641 = vpack.c.b16 %v497, %v485
    %v642 = vpack.c.b16 %v498, %v486
    %v643 = vpack.c.b16 %v499, %v487
    %v644 = vpack.c.b16 %v500, %v488
    %v645 = vpack.c.b16 %v501, %v489
    %v646 = vpack.c.b16 %v502, %v490
    %v647 = vpack.c.b16 %v503, %v491
    %v648 = vpack.c.b16 %v504, %v492
    %v649 = vpack.c.b16 %v517, %v505
    %v650 = vpack.c.b16 %v518, %v506
    %v651 = vpack.c.b16 %v519, %v507
    %v652 = vpack.c.b16 %v520, %v508
    %v653 = vpack.c.b16 %v521, %v509
    %v654 = vpack.c.b16 %v522, %v510
    %v655 = vpack.c.b16 %v523, %v511
    %v656 = vpack.c.b16 %v524, %v512
    %v657 = vpack.c.b16 %v525, %v513
    %v658 = vpack.c.b16 %v526, %v514
    %v659 = vpack.c.b16 %v527, %v515
    %v660 = vpack.c.b16 %v528, %v516
    %v661 = vpack.c.b16 %v541, %v529
    %v662 = vpack.c.b16 %v542, %v530
    %v663 = vpack.c.b16 %v543, %v531
    %v664 = vpack.c.b16 %v544, %v532
    %v665 = vpack.c.b16 %v545, %v533
    %v666 = vpack.c.b16 %v546, %v534
    %v667 = vpack.c.b16 %v547, %v535
    %v668 = vpack.c.b16 %v548, %v536
    %v669 = vpack.c.b16 %v549, %v537
    %v670 = vpack.c.b16 %v550, %v538
    %v671 = vpack.c.b16 %v551, %v539
    %v672 = vpack.c.b16 %v552, %v540
    %v673 = vpack.c.b16 %v565, %v553
    %v674 = vpack.c.b16 %v566, %v554
    %v675 = vpack.c.b16 %v567, %v555
    %v676 = vpack.c.b16 %v568, %v556
    %v677 = vpack.c.b16 %v569, %v557
    %v678 = vpack.c.b16 %v570, %v558
    %v679 = vpack.c.b16 %v571, %v559
    %v680 = vpack.c.b16 %v572, %v560
    %v681 = vpack.c.b16 %v573, %v561
    %v682 = vpack.c.b16 %v574, %v562
    %v683 = vpack.c.b16 %v575, %v563
    %v684 = vpack.c.b16 %v576, %v564
    %v685 = vpack.c.b16 %v589, %v577
    %v686 = vpack.c.b16 %v590, %v578
    %v687 = vpack.c.b16 %v591, %v579
    %v688 = vpack.c.b16 %v592, %v580
    %v689 = vpack.c.b16 %v593, %v581
    %v690 = vpack.c.b16 %v594, %v582
    %v691 = vpack.c.b16 %v595, %v583
    %v692 = vpack.c.b16 %v596, %v584
    %v693 = vpack.c.b16 %v597, %v585
    %v694 = vpack.c.b16 %v598, %v586
    %v695 = vpack.c.b16 %v599, %v587
    %v696 = vpack.c.b16 %v600, %v588
    %v985 = vunpack.c.l.b16 %v121
    %v986 = vunpack.c.l.b16 %v122
    %v987 = vunpack.c.l.b16 %v123
    %v988 = vunpack.c.l.b16 %v124
    %v989 = vunpack.c.l.b16 %v125
    %v990 = vunpack.c.l.b16 %v126
    %v991 = vunpack.c.l.b16 %v127
    %v992 = vunpack.c.l.b16 %v128
    %v993 = vunpack.c.l.b16 %v129
    %v994 = vunpack.c.l.b16 %v130
    %v995 = vunpack.c.l.b16 %v131
    %v996 = vunpack.c.l.b16 %v132
    %v997 = vunpack.c.l.b16 %v133
    %v998 = vunpack.c.l.b16 %v134
    %v999 = vunpack.c.l.b16 %v135
    %v1000 = vunpack.c.l.b16 %v136
    %v1001 = vunpack.c.l.b16 %v137
    %v1002 = vunpack.c.l.b16 %v138
    %v1003 = vunpack.c.l.b16 %v139
    %v1004 = vunpack.c.l.b16 %v140
    %v1005 = vunpack.c.l.b16 %v141
    %v1006 = vunpack.c.l.b16 %v142
    %v1007 = vunpack.c.l.b16 %v143
    %v1008 = vunpack.c.l.b16 %v144
    %v1009 = vunpack.c.l.b16 %v145
    %v1010 = vunpack.c.l.b16 %v146
    %v1011 = vunpack.c.l.b16 %v147
    %v1012 = vunpack.c.l.b16 %v148
    %v1013 = vunpack.c.l.b16 %v149
    %v1014 = vunpack.c.l.b16 %v150
    %v1015 = vunpack.c.l.b16 %v151
    %v1016 = vunpack.c.l.b16 %v152
    %v1017 = vunpack.c.l.b16 %v153
    %v1018 = vunpack.c.l.b16 %v154
    %v1019 = vunpack.c.l.b16 %v155
    %v1020 = vunpack.c.l.b16 %v156
    %v1021 = vunpack.c.l.b16 %v157
    %v1022 = vunpack.c.l.b16 %v158
    %v1023 = vunpack.c.l.b16 %v159
    %v1024 = vunpack.c.l.b16 %v160
    %v1025 = vunpack.c.l.b16 %v161
    %v1026 = vunpack.c.l.b16 %v162
    %v1027 = vunpack.c.l.b16 %v163
    %v1028 = vunpack.c.l.b16 %v164
    %v1029 = vunpack.c.l.b16 %v165
    %v1030 = vunpack.c.l.b16 %v166
    %v1031 = vunpack.c.l.b16 %v167
    %v1032 = vunpack.c.l.b16 %v168
    %v1033 = vunpack.c.l.b16 %v169
    %v1034 = vunpack.c.l.b16 %v170
    %v1035 = vunpack.c.l.b16 %v171
    %v1036 = vunpack.c.l.b16 %v172
    %v1037 = vunpack.c.l.b16 %v173
    %v1038 = vunpack.c.l.b16 %v174
    %v1039 = vunpack.c.l.b16 %v175
    %v1040 = vunpack.c.l.b16 %v176
    %v1041 = vunpack.c.l.b16 %v177
    %v1042 = vunpack.c.l.b16 %v178
    %v1043 = vunpack.c.l.b16 %v179
    %v1044 = vunpack.c.l.b16 %v180
    %v1045 = vunpack.c.l.b16 %v181
    %v1046 = vunpack.c.l.b16 %v182
    %v1047 = vunpack.c.l.b16 %v183
    %v1048 = vunpack.c.l.b16 %v184
    %v1049 = vunpack.c.l.b16 %v185
    %v1050 = vunpack.c.l.b16 %v186
    %v1051 = vunpack.c.l.b16 %v187
    %v1052 = vunpack.c.l.b16 %v188
    %v1053 = vunpack.c.l.b16 %v189
    %v1054 = vunpack.c.l.b16 %v190
    %v1055 = vunpack.c.l.b16 %v191
    %v1056 = vunpack.c.l.b16 %v192
    %v1057 = vunpack.c.l.b16 %v193
    %v1058 = vunpack.c.l.b16 %v194
    %v1059 = vunpack.c.l.b16 %v195
    %v1060 = vunpack.c.l.b16 %v196
    %v1061 = vunpack.c.l.b16 %v197
    %v1062 = vunpack.c.l.b16 %v198
    %v1063 = vunpack.c.l.b16 %v199
    %v1064 = vunpack.c.l.b16 %v200
    %v1065 = vunpack.c.l.b16 %v201
    %v1066 = vunpack.c.l.b16 %v202
    %v1067 = vunpack.c.l.b16 %v203
    %v1068 = vunpack.c.l.b16 %v204
    %v1069 = vunpack.c.l.b16 %v205
    %v1070 = vunpack.c.l.b16 %v206
    %v1071 = vunpack.c.l.b16 %v207
    %v1072 = vunpack.c.l.b16 %v208
    %v1073 = vunpack.c.l.b16 %v209
    %v1074 = vunpack.c.l.b16 %v210
    %v1075 = vunpack.c.l.b16 %v211
    %v1076 = vunpack.c.l.b16 %v212
    %v1077 = vunpack.c.l.b16 %v213
    %v1078 = vunpack.c.l.b16 %v214
    %v1079 = vunpack.c.l.b16 %v215
    %v1080 = vunpack.c.l.b16 %v216
    %v1081 = vunpack.c.l.b16 %v217
    %v1082 = vunpack.c.l.b16 %v218
    %v1083 = vunpack.c.l.b16 %v219
    %v1084 = vunpack.c.l.b16 %v220
    %v1085 = vunpack.c.l.b16 %v221
    %v1086 = vunpack.c.l.b16 %v222
    %v1087 = vunpack.c.l.b16 %v223
    %v1088 = vunpack.c.l.b16 %v224
    %v1089 = vunpack.c.l.b16 %v225
    %v1090 = vunpack.c.l.b16 %v226
    %v1091 = vunpack.c.l.b16 %v227
    %v1092 = vunpack.c.l.b16 %v228
    %v1093 = vunpack.c.l.b16 %v229
    %v1094 = vunpack.c.l.b16 %v230
    %v1095 = vunpack.c.l.b16 %v231
    %v1096 = vunpack.c.l.b16 %v232
    %v1097 = vunpack.c.l.b16 %v233
    %v1098 = vunpack.c.l.b16 %v234
    %v1099 = vunpack.c.l.b16 %v235
    %v1100 = vunpack.c.l.b16 %v236
    %v1101 = vunpack.c.l.b16 %v237
    %v1102 = vunpack.c.l.b16 %v238
    %v1103 = vunpack.c.l.b16 %v239
    %v1104 = vunpack.c.l.b16 %v240
    %v1105 = vunpack.c.l.b16 %v241
    %v1106 = vunpack.c.l.b16 %v242
    %v1107 = vunpack.c.l.b16 %v243
    %v1108 = vunpack.c.l.b16 %v244
    %v1109 = vunpack.c.l.b16 %v245
    %v1110 = vunpack.c.l.b16 %v246
    %v1111 = vunpack.c.l.b16 %v247
    %v1112 = vunpack.c.l.b16 %v248
    %v1113 = vunpack.c.l.b16 %v249
    %v1114 = vunpack.c.l.b16 %v250
    %v1115 = vunpack.c.l.b16 %v251
    %v1116 = vunpack.c.l.b16 %v252
    %v1117 = vunpack.c.l.b16 %v253
    %v1118 = vunpack.c.l.b16 %v254
    %v1119 = vunpack.c.l.b16 %v255
    %v1120 = vunpack.c.l.b16 %v256
    %v1121 = vunpack.c.l.b16 %v257
    %v1122 = vunpack.c.l.b16 %v258
    %v1123 = vunpack.c.l.b16 %v259
    %v1124 = vunpack.c.l.b16 %v260
    %v1125 = vunpack.c.l.b16 %v261
    %v1126 = vunpack.c.l.b16 %v262
    %v1127 = vunpack.c.l.b16 %v263
    %v1128 = vunpack.c.l.b16 %v264
    %v1129 = vunpack.c.l.b16 %v265
    %v1130 = vunpack.c.l.b16 %v266
    %v1131 = vunpack.c.l.b16 %v267
    %v1132 = vunpack.c.l.b16 %v268
    %v1133 = vunpack.c.l.b16 %v269
    %v1134 = vunpack.c.l.b16 %v270
    %v1135 = vunpack.c.l.b16 %v271
    %v1136 = vunpack.c.l.b16 %v272
    %v1137 = vunpack.c.l.b16 %v273
    %v1138 = vunpack.c.l.b16 %v274
    %v1139 = vunpack.c.l.b16 %v275
    %v1140 = vunpack.c.l.b16 %v276
    %v1141 = vunpack.c.l.b16 %v277
    %v1142 = vunpack.c.l.b16 %v278
    %v1143 = vunpack.c.l.b16 %v279
    %v1144 = vunpack.c.l.b16 %v280
    %v1145 = vunpack.c.l.b16 %v281
    %v1146 = vunpack.c.l.b16 %v282
    %v1147 = vunpack.c.l.b16 %v283
    %v1148 = vunpack.c.l.b16 %v284
    %v1149 = vunpack.c.l.b16 %v285
    %v1150 = vunpack.c.l.b16 %v286
    %v1151 = vunpack.c.l.b16 %v287
    %v1152 = vunpack.c.l.b16 %v288
    %v1153 = vunpack.c.l.b16 %v289
    %v1154 = vunpack.c.l.b16 %v290
    %v1155 = vunpack.c.l.b16 %v291
    %v1156 = vunpack.c.l.b16 %v292
    %v1157 = vunpack.c.l.b16 %v293
    %v1158 = vunpack.c.l.b16 %v294
    %v1159 = vunpack.c.l.b16 %v295
    %v1160 = vunpack.c.l.b16 %v296
    %v1161 = vunpack.c.l.b16 %v297
    %v1162 = vunpack.c.l.b16 %v298
    %v1163 = vunpack.c.l.b16 %v299
    %v1164 = vunpack.c.l.b16 %v300
    %v1165 = vunpack.c.l.b16 %v301
    %v1166 = vunpack.c.l.b16 %v302
    %v1167 = vunpack.c.l.b16 %v303
    %v1168 = vunpack.c.l.b16 %v304
    %v1169 = vunpack.c.l.b16 %v305
    %v1170 = vunpack.c.l.b16 %v306
    %v1171 = vunpack.c.l.b16 %v307
    %v1172 = vunpack.c.l.b16 %v308
    %v1173 = vunpack.c.l.b16 %v309
    %v1174 = vunpack.c.l.b16 %v310
    %v1175 = vunpack.c.l.b16 %v311
    %v1176 = vunpack.c.l.b16 %v312
    %v1177 = vpack.c.b16 %v986, %v985
    %v1178 = vpack.c.b16 %v988, %v987
    %v1179 = vpack.c.b16 %v990, %v989
    %v1180 = vpack.c.b16 %v992, %v991
    %v1181 = vpack.c.b16 %v994, %v993
    %v1182 = vpack.c.b16 %v996, %v995
    %v1183 = vpack.c.b16 %v998, %v997
    %v1184 = vpack.c.b16 %v1000, %v999
    %v1185 = vpack.c.b16 %v1002, %v1001
    %v1186 = vpack.c.b16 %v1004, %v1003
    %v1187 = vpack.c.b16 %v1006, %v1005
    %v1188 = vpack.c.b16 %v1008, %v1007
    %v1189 = vpack.c.b16 %v1010, %v1009
    %v1190 = vpack.c.b16 %v1012, %v1011
    %v1191 = vpack.c.b16 %v1014, %v1013
    %v1192 = vpack.c.b16 %v1016, %v1015
    %v1193 = vpack.c.b16 %v1018, %v1017
    %v1194 = vpack.c.b16 %v1020, %v1019
    %v1195 = vpack.c.b16 %v1022, %v1021
    %v1196 = vpack.c.b16 %v1024, %v1023
    %v1197 = vpack.c.b16 %v1026, %v1025
    %v1198 = vpack.c.b16 %v1028, %v1027
    %v1199 = vpack.c.b16 %v1030, %v1029
    %v1200 = vpack.c.b16 %v1032, %v1031
    %v1201 = vpack.c.b16 %v1034, %v1033
    %v1202 = vpack.c.b16 %v1036, %v1035
    %v1203 = vpack.c.b16 %v1038, %v1037
    %v1204 = vpack.c.b16 %v1040, %v1039
    %v1205 = vpack.c.b16 %v1042, %v1041
    %v1206 = vpack.c.b16 %v1044, %v1043
    %v1207 = vpack.c.b16 %v1046, %v1045
    %v1208 = vpack.c.b16 %v1048, %v1047
    %v1209 = vpack.c.b16 %v1050, %v1049
    %v1210 = vpack.c.b16 %v1052, %v1051
    %v1211 = vpack.c.b16 %v1054, %v1053
    %v1212 = vpack.c.b16 %v1056, %v1055
    %v1213 = vpack.c.b16 %v1058, %v1057
    %v1214 = vpack.c.b16 %v1060, %v1059
    %v1215 = vpack.c.b16 %v1062, %v1061
    %v1216 = vpack.c.b16 %v1064, %v1063
    %v1217 = vpack.c.b16 %v1066, %v1065
    %v1218 = vpack.c.b16 %v1068, %v1067
    %v1219 = vpack.c.b16 %v1070, %v1069
    %v1220 = vpack.c.b16 %v1072, %v1071
    %v1221 = vpack.c.b16 %v1074, %v1073
    %v1222 = vpack.c.b16 %v1076, %v1075
    %v1223 = vpack.c.b16 %v1078, %v1077
    %v1224 = vpack.c.b16 %v1080, %v1079
    %v1225 = vpack.c.b16 %v1082, %v1081
    %v1226 = vpack.c.b16 %v1084, %v1083
    %v1227 = vpack.c.b16 %v1086, %v1085
    %v1228 = vpack.c.b16 %v1088, %v1087
    %v1229 = vpack.c.b16 %v1090, %v1089
    %v1230 = vpack.c.b16 %v1092, %v1091
    %v1231 = vpack.c.b16 %v1094, %v1093
    %v1232 = vpack.c.b16 %v1096, %v1095
    %v1233 = vpack.c.b16 %v1098, %v1097
    %v1234 = vpack.c.b16 %v1100, %v1099
    %v1235 = vpack.c.b16 %v1102, %v1101
    %v1236 = vpack.c.b16 %v1104, %v1103
    %v1237 = vpack.c.b16 %v1106, %v1105
    %v1238 = vpack.c.b16 %v1108, %v1107
    %v1239 = vpack.c.b16 %v1110, %v1109
    %v1240 = vpack.c.b16 %v1112, %v1111
    %v1241 = vpack.c.b16 %v1114, %v1113
    %v1242 = vpack.c.b16 %v1116, %v1115
    %v1243 = vpack.c.b16 %v1118, %v1117
    %v1244 = vpack.c.b16 %v1120, %v1119
    %v1245 = vpack.c.b16 %v1122, %v1121
    %v1246 = vpack.c.b16 %v1124, %v1123
    %v1247 = vpack.c.b16 %v1126, %v1125
    %v1248 = vpack.c.b16 %v1128, %v1127
    %v1249 = vpack.c.b16 %v1130, %v1129
    %v1250 = vpack.c.b16 %v1132, %v1131
    %v1251 = vpack.c.b16 %v1134, %v1133
    %v1252 = vpack.c.b16 %v1136, %v1135
    %v1253 = vpack.c.b16 %v1138, %v1137
    %v1254 = vpack.c.b16 %v1140, %v1139
    %v1255 = vpack.c.b16 %v1142, %v1141
    %v1256 = vpack.c.b16 %v1144, %v1143
    %v1257 = vpack.c.b16 %v1146, %v1145
    %v1258 = vpack.c.b16 %v1148, %v1147
    %v1259 = vpack.c.b16 %v1150, %v1149
    %v1260 = vpack.c.b16 %v1152, %v1151
    %v1261 = vpack.c.b16 %v1154, %v1153
    %v1262 = vpack.c.b16 %v1156, %v1155
    %v1263 = vpack.c.b16 %v1158, %v1157
    %v1264 = vpack.c.b16 %v1160, %v1159
    %v1265 = vpack.c.b16 %v1162, %v1161
    %v1266 = vpack.c.b16 %v1164, %v1163
    %v1267 = vpack.c.b16 %v1166, %v1165
    %v1268 = vpack.c.b16 %v1168, %v1167
    %v1269 = vpack.c.b16 %v1170, %v1169
    %v1270 = vpack.c.b16 %v1172, %v1171
    %v1271 = vpack.c.b16 %v1174, %v1173
    %v1272 = vpack.c.b16 %v1176, %v1175
    %1369 = vmatprep.subr.bf16.mxu0 0
    %1370 = vmatpush1.bf16.msra.mxu0 %v1177
    %1371 = vmatprep.subr.bf16.mxu0 0
    %1372 = vmatpush1.bf16.msra.mxu0 %v1178
    %1373 = vmatprep.subr.bf16.mxu0 0
    %1374 = vmatpush1.bf16.msra.mxu0 %v1179
    %1375 = vmatprep.subr.bf16.mxu0 0
    %1376 = vmatpush1.bf16.msra.mxu0 %v1180
    %1377 = vmatprep.subr.bf16.mxu0 0
    %1378 = vmatpush1.bf16.msra.mxu0 %v1181
    %1379 = vmatprep.subr.bf16.mxu0 0
    %1380 = vmatpush1.bf16.msra.mxu0 %v1182
    %1381 = vmatprep.subr.bf16.mxu0 0
    %1382 = vmatpush1.bf16.msra.mxu0 %v1183
    %1383 = vmatprep.subr.bf16.mxu0 0
    %1384 = vmatpush1.bf16.msra.mxu0 %v1184
    %1385 = vmatprep.subr.bf16.mxu0 0
    %1386 = vmatpush1.bf16.msra.mxu0 %v1185
    %1387 = vmatprep.subr.bf16.mxu0 0
    %1388 = vmatpush1.bf16.msra.mxu0 %v1186
    %1389 = vmatprep.subr.bf16.mxu0 0
    %1390 = vmatpush1.bf16.msra.mxu0 %v1187
    %1391 = vmatprep.subr.bf16.mxu0 0
    %1392 = vmatpush1.bf16.msra.mxu0 %v1188
    %1393 = vmatprep.subr.bf16.mxu0 0
    %1394 = vmatpush1.bf16.msra.mxu0 %v1189
    %1395 = vmatprep.subr.bf16.mxu0 0
    %1396 = vmatpush1.bf16.msra.mxu0 %v1190
    %1397 = vmatprep.subr.bf16.mxu0 0
    %1398 = vmatpush1.bf16.msra.mxu0 %v1191
    %1399 = vmatprep.subr.bf16.mxu0 0
    %1400 = vmatpush1.bf16.msra.mxu0 %v1192
    %1401 = vmatprep.mubr.bf16.mxu0 %v602
    %1402 = vmatmul.mubr.bf16.gmra.mrb[0].mxu0 %v601
    %v1403 = vpop.f32.mrb[0].mxu0
    %v1404 = vadd.f32 0.0, %v1403
    %v1405 = vpop.f32.mrb[0].mxu0
    %v1406 = vpop.f32.mrb[0].mxu0
    %v1407 = vadd.f32 0.0, %v1406
    %v1408 = vpop.f32.mrb[0].mxu0
    %1409 = vmatprep.mubr.bf16.mxu0 %v614
    %1410 = vmatmul.mubr.bf16.gmra.mrb[0].mxu0 %v613
    %v1411 = vpop.f32.mrb[0].mxu0
    %v1412 = vadd.f32 0.0, %v1411
    %v1413 = vpop.f32.mrb[0].mxu0
    %v1414 = vpop.f32.mrb[0].mxu0
    %v1415 = vadd.f32 0.0, %v1414
    %v1416 = vpop.f32.mrb[0].mxu0
    %1417 = vmatprep.mubr.bf16.mxu0 %v626
    %1418 = vmatmul.mubr.bf16.gmra.mrb[0].mxu0 %v625
    %v1419 = vpop.f32.mrb[0].mxu0
    %v1420 = vadd.f32 0.0, %v1419
    %v1421 = vpop.f32.mrb[0].mxu0
    %v1422 = vpop.f32.mrb[0].mxu0
    %v1423 = vadd.f32 0.0, %v1422
    %v1424 = vpop.f32.mrb[0].mxu0
    %1425 = vmatprep.mubr.bf16.mxu0 %v638
    %1426 = vmatmul.mubr.bf16.gmra.mrb[0].mxu0 %v637
    %v1427 = vpop.f32.mrb[0].mxu0
    %v1428 = vadd.f32 0.0, %v1427
    %v1429 = vpop.f32.mrb[0].mxu0
    %v1430 = vpop.f32.mrb[0].mxu0
    %v1431 = vadd.f32 0.0, %v1430
    %v1432 = vpop.f32.mrb[0].mxu0
    %1433 = vmatprep.mubr.bf16.mxu0 %v650
    %1434 = vmatmul.mubr.bf16.gmra.mrb[0].mxu0 %v649
    %v1435 = vpop.f32.mrb[0].mxu0
    %v1436 = vadd.f32 0.0, %v1435
    %v1437 = vpop.f32.mrb[0].mxu0
    %v1438 = vpop.f32.mrb[0].mxu0
    %v1439 = vadd.f32 0.0, %v1438
    %v1440 = vpop.f32.mrb[0].mxu0
    %1441 = vmatprep.mubr.bf16.mxu0 %v662
    %1442 = vmatmul.mubr.bf16.gmra.mrb[0].mxu0 %v661
    %v1443 = vpop.f32.mrb[0].mxu0
    %v1444 = vadd.f32 0.0, %v1443
    %v1445 = vpop.f32.mrb[0].mxu0
    %v1446 = vpop.f32.mrb[0].mxu0
    %v1447 = vadd.f32 0.0, %v1446
    %v1448 = vpop.f32.mrb[0].mxu0
    %1449 = vmatprep.mubr.bf16.mxu0 %v674
    %1450 = vmatmul.mubr.bf16.gmra.mrb[0].mxu0 %v673
    %v1451 = vpop.f32.mrb[0].mxu0
    %v1452 = vadd.f32 0.0, %v1451
    %v1453 = vpop.f32.mrb[0].mxu0
    %v1454 = vpop.f32.mrb[0].mxu0
    %v1455 = vadd.f32 0.0, %v1454
    %v1456 = vpop.f32.mrb[0].mxu0
    %1457 = vmatprep.mubr.bf16.mxu0 %v686
    %1458 = vmatmul.mubr.bf16.gmra.mrb[0].mxu0 %v685
    %v1459 = vpop.f32.mrb[0].mxu0
    %v1460 = vadd.f32 0.0, %v1459
    %v1461 = vpop.f32.mrb[0].mxu0
    %v1462 = vpop.f32.mrb[0].mxu0
    %v1463 = vadd.f32 0.0, %v1462
    %v1464 = vpop.f32.mrb[0].mxu0
    %1465 = vdwg.mxu0
    %1466 = vmatprep.subr.bf16.mxu0 0
    %1467 = vmatpush1.bf16.msra.mxu0 %v1193
    %1468 = vmatprep.subr.bf16.mxu0 0
    %1469 = vmatpush1.bf16.msra.mxu0 %v1194
    %1470 = vmatprep.subr.bf16.mxu0 0
    %1471 = vmatpush1.bf16.msra.mxu0 %v1195
    %1472 = vmatprep.subr.bf16.mxu0 0
    %1473 = vmatpush1.bf16.msra.mxu0 %v1196
    %1474 = vmatprep.subr.bf16.mxu0 0
    %1475 = vmatpush1.bf16.msra.mxu0 %v1197
    %1476 = vmatprep.subr.bf16.mxu0 0
    %1477 = vmatpush1.bf16.msra.mxu0 %v1198
    %1478 = vmatprep.subr.bf16.mxu0 0
    %1479 = vmatpush1.bf16.msra.mxu0 %v1199
    %1480 = vmatprep.subr.bf16.mxu0 0
    %1481 = vmatpush1.bf16.msra.mxu0 %v1200
    %1482 = vmatprep.subr.bf16.mxu0 0
    %1483 = vmatpush1.bf16.msra.mxu0 %v1201
    %1484 = vmatprep.subr.bf16.mxu0 0
    %1485 = vmatpush1.bf16.msra.mxu0 %v1202
    %1486 = vmatprep.subr.bf16.mxu0 0
    %1487 = vmatpush1.bf16.msra.mxu0 %v1203
    %1488 = vmatprep.subr.bf16.mxu0 0
    %1489 = vmatpush1.bf16.msra.mxu0 %v1204
    %1490 = vmatprep.subr.bf16.mxu0 0
    %1491 = vmatpush1.bf16.msra.mxu0 %v1205
    %1492 = vmatprep.subr.bf16.mxu0 0
    %1493 = vmatpush1.bf16.msra.mxu0 %v1206
    %1494 = vmatprep.subr.bf16.mxu0 0
    %1495 = vmatpush1.bf16.msra.mxu0 %v1207
    %1496 = vmatprep.subr.bf16.mxu0 0
    %1497 = vmatpush1.bf16.msra.mxu0 %v1208
    %1498 = vmatprep.mubr.bf16.mxu0 %v604
    %1499 = vmatmul.mubr.bf16.gmra.mrb[0].mxu0 %v603
    %v1500 = vpop.f32.mrb[0].mxu0
    %v1501 = vadd.f32 %v1404, %v1500
    %v1502 = vpop.f32.mrb[0].mxu0
    %v1503 = vpop.f32.mrb[0].mxu0
    %v1504 = vadd.f32 %v1407, %v1503
    %v1505 = vpop.f32.mrb[0].mxu0
    %1506 = vmatprep.mubr.bf16.mxu0 %v616
    %1507 = vmatmul.mubr.bf16.gmra.mrb[0].mxu0 %v615
    %v1508 = vpop.f32.mrb[0].mxu0
    %v1509 = vadd.f32 %v1412, %v1508
    %v1510 = vpop.f32.mrb[0].mxu0
    %v1511 = vpop.f32.mrb[0].mxu0
    %v1512 = vadd.f32 %v1415, %v1511
    %v1513 = vpop.f32.mrb[0].mxu0
    %1514 = vmatprep.mubr.bf16.mxu0 %v628
    %1515 = vmatmul.mubr.bf16.gmra.mrb[0].mxu0 %v627
    %v1516 = vpop.f32.mrb[0].mxu0
    %v1517 = vadd.f32 %v1420, %v1516
    %v1518 = vpop.f32.mrb[0].mxu0
    %v1519 = vpop.f32.mrb[0].mxu0
    %v1520 = vadd.f32 %v1423, %v1519
    %v1521 = vpop.f32.mrb[0].mxu0
    %1522 = vmatprep.mubr.bf16.mxu0 %v640
    %1523 = vmatmul.mubr.bf16.gmra.mrb[0].mxu0 %v639
    %v1524 = vpop.f32.mrb[0].mxu0
    %v1525 = vadd.f32 %v1428, %v1524
    %v1526 = vpop.f32.mrb[0].mxu0
    %v1527 = vpop.f32.mrb[0].mxu0
    %v1528 = vadd.f32 %v1431, %v1527
    %v1529 = vpop.f32.mrb[0].mxu0
    %1530 = vmatprep.mubr.bf16.mxu0 %v652
    %1531 = vmatmul.mubr.bf16.gmra.mrb[0].mxu0 %v651
    %v1532 = vpop.f32.mrb[0].mxu0
    %v1533 = vadd.f32 %v1436, %v1532
    %v1534 = vpop.f32.mrb[0].mxu0
    %v1535 = vpop.f32.mrb[0].mxu0
    %v1536 = vadd.f32 %v1439, %v1535
    %v1537 = vpop.f32.mrb[0].mxu0
    %1538 = vmatprep.mubr.bf16.mxu0 %v664
    %1539 = vmatmul.mubr.bf16.gmra.mrb[0].mxu0 %v663
    %v1540 = vpop.f32.mrb[0].mxu0
    %v1541 = vadd.f32 %v1444, %v1540
    %v1542 = vpop.f32.mrb[0].mxu0
    %v1543 = vpop.f32.mrb[0].mxu0
    %v1544 = vadd.f32 %v1447, %v1543
    %v1545 = vpop.f32.mrb[0].mxu0
    %1546 = vmatprep.mubr.bf16.mxu0 %v676
    %1547 = vmatmul.mubr.bf16.gmra.mrb[0].mxu0 %v675
    %v1548 = vpop.f32.mrb[0].mxu0
    %v1549 = vadd.f32 %v1452, %v1548
    %v1550 = vpop.f32.mrb[0].mxu0
    %v1551 = vpop.f32.mrb[0].mxu0
    %v1552 = vadd.f32 %v1455, %v1551
    %v1553 = vpop.f32.mrb[0].mxu0
    %1554 = vmatprep.mubr.bf16.mxu0 %v688
    %1555 = vmatmul.mubr.bf16.gmra.mrb[0].mxu0 %v687
    %v1556 = vpop.f32.mrb[0].mxu0
    %v1557 = vadd.f32 %v1460, %v1556
    %v1558 = vpop.f32.mrb[0].mxu0
    %v1559 = vpop.f32.mrb[0].mxu0
    %v1560 = vadd.f32 %v1463, %v1559
    %v1561 = vpop.f32.mrb[0].mxu0
    %1562 = vdwg.mxu0
    %1563 = vmatprep.subr.bf16.mxu0 0
    %1564 = vmatpush1.bf16.msra.mxu0 %v1209
    %1565 = vmatprep.subr.bf16.mxu0 0
    %1566 = vmatpush1.bf16.msra.mxu0 %v1210
    %1567 = vmatprep.subr.bf16.mxu0 0
    %1568 = vmatpush1.bf16.msra.mxu0 %v1211
    %1569 = vmatprep.subr.bf16.mxu0 0
    %1570 = vmatpush1.bf16.msra.mxu0 %v1212
    %1571 = vmatprep.subr.bf16.mxu0 0
    %1572 = vmatpush1.bf16.msra.mxu0 %v1213
    %1573 = vmatprep.subr.bf16.mxu0 0
    %1574 = vmatpush1.bf16.msra.mxu0 %v1214
    %1575 = vmatprep.subr.bf16.mxu0 0
    %1576 = vmatpush1.bf16.msra.mxu0 %v1215
    %1577 = vmatprep.subr.bf16.mxu0 0
    %1578 = vmatpush1.bf16.msra.mxu0 %v1216
    %1579 = vmatprep.subr.bf16.mxu0 0
    %1580 = vmatpush1.bf16.msra.mxu0 %v1217
    %1581 = vmatprep.subr.bf16.mxu0 0
    %1582 = vmatpush1.bf16.msra.mxu0 %v1218
    %1583 = vmatprep.subr.bf16.mxu0 0
    %1584 = vmatpush1.bf16.msra.mxu0 %v1219
    %1585 = vmatprep.subr.bf16.mxu0 0
    %1586 = vmatpush1.bf16.msra.mxu0 %v1220
    %1587 = vmatprep.subr.bf16.mxu0 0
    %1588 = vmatpush1.bf16.msra.mxu0 %v1221
    %1589 = vmatprep.subr.bf16.mxu0 0
    %1590 = vmatpush1.bf16.msra.mxu0 %v1222
    %1591 = vmatprep.subr.bf16.mxu0 0
    %1592 = vmatpush1.bf16.msra.mxu0 %v1223
    %1593 = vmatprep.subr.bf16.mxu0 0
    %1594 = vmatpush1.bf16.msra.mxu0 %v1224
    %1595 = vmatprep.mubr.bf16.mxu0 %v606
    %1596 = vmatmul.mubr.bf16.gmra.mrb[0].mxu0 %v605
    %v1597 = vpop.f32.mrb[0].mxu0
    %v1598 = vadd.f32 %v1501, %v1597
    %v1599 = vpop.f32.mrb[0].mxu0
    %v1600 = vpop.f32.mrb[0].mxu0
    %v1601 = vadd.f32 %v1504, %v1600
    %v1602 = vpop.f32.mrb[0].mxu0
    %1603 = vmatprep.mubr.bf16.mxu0 %v618
    %1604 = vmatmul.mubr.bf16.gmra.mrb[0].mxu0 %v617
    %v1605 = vpop.f32.mrb[0].mxu0
    %v1606 = vadd.f32 %v1509, %v1605
    %v1607 = vpop.f32.mrb[0].mxu0
    %v1608 = vpop.f32.mrb[0].mxu0
    %v1609 = vadd.f32 %v1512, %v1608
    %v1610 = vpop.f32.mrb[0].mxu0
    %1611 = vmatprep.mubr.bf16.mxu0 %v630
    %1612 = vmatmul.mubr.bf16.gmra.mrb[0].mxu0 %v629
    %v1613 = vpop.f32.mrb[0].mxu0
    %v1614 = vadd.f32 %v1517, %v1613
    %v1615 = vpop.f32.mrb[0].mxu0
    %v1616 = vpop.f32.mrb[0].mxu0
    %v1617 = vadd.f32 %v1520, %v1616
    %v1618 = vpop.f32.mrb[0].mxu0
    %1619 = vmatprep.mubr.bf16.mxu0 %v642
    %1620 = vmatmul.mubr.bf16.gmra.mrb[0].mxu0 %v641
    %v1621 = vpop.f32.mrb[0].mxu0
    %v1622 = vadd.f32 %v1525, %v1621
    %v1623 = vpop.f32.mrb[0].mxu0
    %v1624 = vpop.f32.mrb[0].mxu0
    %v1625 = vadd.f32 %v1528, %v1624
    %v1626 = vpop.f32.mrb[0].mxu0
    %1627 = vmatprep.mubr.bf16.mxu0 %v654
    %1628 = vmatmul.mubr.bf16.gmra.mrb[0].mxu0 %v653
    %v1629 = vpop.f32.mrb[0].mxu0
    %v1630 = vadd.f32 %v1533, %v1629
    %v1631 = vpop.f32.mrb[0].mxu0
    %v1632 = vpop.f32.mrb[0].mxu0
    %v1633 = vadd.f32 %v1536, %v1632
    %v1634 = vpop.f32.mrb[0].mxu0
    %1635 = vmatprep.mubr.bf16.mxu0 %v666
    %1636 = vmatmul.mubr.bf16.gmra.mrb[0].mxu0 %v665
    %v1637 = vpop.f32.mrb[0].mxu0
    %v1638 = vadd.f32 %v1541, %v1637
    %v1639 = vpop.f32.mrb[0].mxu0
    %v1640 = vpop.f32.mrb[0].mxu0
    %v1641 = vadd.f32 %v1544, %v1640
    %v1642 = vpop.f32.mrb[0].mxu0
    %1643 = vmatprep.mubr.bf16.mxu0 %v678
    %1644 = vmatmul.mubr.bf16.gmra.mrb[0].mxu0 %v677
    %v1645 = vpop.f32.mrb[0].mxu0
    %v1646 = vadd.f32 %v1549, %v1645
    %v1647 = vpop.f32.mrb[0].mxu0
    %v1648 = vpop.f32.mrb[0].mxu0
    %v1649 = vadd.f32 %v1552, %v1648
    %v1650 = vpop.f32.mrb[0].mxu0
    %1651 = vmatprep.mubr.bf16.mxu0 %v690
    %1652 = vmatmul.mubr.bf16.gmra.mrb[0].mxu0 %v689
    %v1653 = vpop.f32.mrb[0].mxu0
    %v1654 = vadd.f32 %v1557, %v1653
    %v1655 = vpop.f32.mrb[0].mxu0
    %v1656 = vpop.f32.mrb[0].mxu0
    %v1657 = vadd.f32 %v1560, %v1656
    %v1658 = vpop.f32.mrb[0].mxu0
    %1659 = vdwg.mxu0
    %1660 = vmatprep.subr.bf16.mxu0 0
    %1661 = vmatpush1.bf16.msra.mxu0 %v1225
    %1662 = vmatprep.subr.bf16.mxu0 0
    %1663 = vmatpush1.bf16.msra.mxu0 %v1226
    %1664 = vmatprep.subr.bf16.mxu0 0
    %1665 = vmatpush1.bf16.msra.mxu0 %v1227
    %1666 = vmatprep.subr.bf16.mxu0 0
    %1667 = vmatpush1.bf16.msra.mxu0 %v1228
    %1668 = vmatprep.subr.bf16.mxu0 0
    %1669 = vmatpush1.bf16.msra.mxu0 %v1229
    %1670 = vmatprep.subr.bf16.mxu0 0
    %1671 = vmatpush1.bf16.msra.mxu0 %v1230
    %1672 = vmatprep.subr.bf16.mxu0 0
    %1673 = vmatpush1.bf16.msra.mxu0 %v1231
    %1674 = vmatprep.subr.bf16.mxu0 0
    %1675 = vmatpush1.bf16.msra.mxu0 %v1232
    %1676 = vmatprep.subr.bf16.mxu0 0
    %1677 = vmatpush1.bf16.msra.mxu0 %v1233
    %1678 = vmatprep.subr.bf16.mxu0 0
    %1679 = vmatpush1.bf16.msra.mxu0 %v1234
    %1680 = vmatprep.subr.bf16.mxu0 0
    %1681 = vmatpush1.bf16.msra.mxu0 %v1235
    %1682 = vmatprep.subr.bf16.mxu0 0
    %1683 = vmatpush1.bf16.msra.mxu0 %v1236
    %1684 = vmatprep.subr.bf16.mxu0 0
    %1685 = vmatpush1.bf16.msra.mxu0 %v1237
    %1686 = vmatprep.subr.bf16.mxu0 0
    %1687 = vmatpush1.bf16.msra.mxu0 %v1238
    %1688 = vmatprep.subr.bf16.mxu0 0
    %1689 = vmatpush1.bf16.msra.mxu0 %v1239
    %1690 = vmatprep.subr.bf16.mxu0 0
    %1691 = vmatpush1.bf16.msra.mxu0 %v1240
    %1692 = vmatprep.mubr.bf16.mxu0 %v608
    %1693 = vmatmul.mubr.bf16.gmra.mrb[0].mxu0 %v607
    %v1694 = vpop.f32.mrb[0].mxu0
    %v1695 = vadd.f32 %v1598, %v1694
    %v1696 = vpop.f32.mrb[0].mxu0
    %v1697 = vpop.f32.mrb[0].mxu0
    %v1698 = vadd.f32 %v1601, %v1697
    %v1699 = vpop.f32.mrb[0].mxu0
    %1700 = vmatprep.mubr.bf16.mxu0 %v620
    %1701 = vmatmul.mubr.bf16.gmra.mrb[0].mxu0 %v619
    %v1702 = vpop.f32.mrb[0].mxu0
    %v1703 = vadd.f32 %v1606, %v1702
    %v1704 = vpop.f32.mrb[0].mxu0
    %v1705 = vpop.f32.mrb[0].mxu0
    %v1706 = vadd.f32 %v1609, %v1705
    %v1707 = vpop.f32.mrb[0].mxu0
    %1708 = vmatprep.mubr.bf16.mxu0 %v632
    %1709 = vmatmul.mubr.bf16.gmra.mrb[0].mxu0 %v631
    %v1710 = vpop.f32.mrb[0].mxu0
    %v1711 = vadd.f32 %v1614, %v1710
    %v1712 = vpop.f32.mrb[0].mxu0
    %v1713 = vpop.f32.mrb[0].mxu0
    %v1714 = vadd.f32 %v1617, %v1713
    %v1715 = vpop.f32.mrb[0].mxu0
    %1716 = vmatprep.mubr.bf16.mxu0 %v644
    %1717 = vmatmul.mubr.bf16.gmra.mrb[0].mxu0 %v643
    %v1718 = vpop.f32.mrb[0].mxu0
    %v1719 = vadd.f32 %v1622, %v1718
    %v1720 = vpop.f32.mrb[0].mxu0
    %v1721 = vpop.f32.mrb[0].mxu0
    %v1722 = vadd.f32 %v1625, %v1721
    %v1723 = vpop.f32.mrb[0].mxu0
    %1724 = vmatprep.mubr.bf16.mxu0 %v656
    %1725 = vmatmul.mubr.bf16.gmra.mrb[0].mxu0 %v655
    %v1726 = vpop.f32.mrb[0].mxu0
    %v1727 = vadd.f32 %v1630, %v1726
    %v1728 = vpop.f32.mrb[0].mxu0
    %v1729 = vpop.f32.mrb[0].mxu0
    %v1730 = vadd.f32 %v1633, %v1729
    %v1731 = vpop.f32.mrb[0].mxu0
    %1732 = vmatprep.mubr.bf16.mxu0 %v668
    %1733 = vmatmul.mubr.bf16.gmra.mrb[0].mxu0 %v667
    %v1734 = vpop.f32.mrb[0].mxu0
    %v1735 = vadd.f32 %v1638, %v1734
    %v1736 = vpop.f32.mrb[0].mxu0
    %v1737 = vpop.f32.mrb[0].mxu0
    %v1738 = vadd.f32 %v1641, %v1737
    %v1739 = vpop.f32.mrb[0].mxu0
    %1740 = vmatprep.mubr.bf16.mxu0 %v680
    %1741 = vmatmul.mubr.bf16.gmra.mrb[0].mxu0 %v679
    %v1742 = vpop.f32.mrb[0].mxu0
    %v1743 = vadd.f32 %v1646, %v1742
    %v1744 = vpop.f32.mrb[0].mxu0
    %v1745 = vpop.f32.mrb[0].mxu0
    %v1746 = vadd.f32 %v1649, %v1745
    %v1747 = vpop.f32.mrb[0].mxu0
    %1748 = vmatprep.mubr.bf16.mxu0 %v692
    %1749 = vmatmul.mubr.bf16.gmra.mrb[0].mxu0 %v691
    %v1750 = vpop.f32.mrb[0].mxu0
    %v1751 = vadd.f32 %v1654, %v1750
    %v1752 = vpop.f32.mrb[0].mxu0
    %v1753 = vpop.f32.mrb[0].mxu0
    %v1754 = vadd.f32 %v1657, %v1753
    %v1755 = vpop.f32.mrb[0].mxu0
    %1756 = vdwg.mxu0
    %1757 = vmatprep.subr.bf16.mxu0 0
    %1758 = vmatpush1.bf16.msra.mxu0 %v1241
    %1759 = vmatprep.subr.bf16.mxu0 0
    %1760 = vmatpush1.bf16.msra.mxu0 %v1242
    %1761 = vmatprep.subr.bf16.mxu0 0
    %1762 = vmatpush1.bf16.msra.mxu0 %v1243
    %1763 = vmatprep.subr.bf16.mxu0 0
    %1764 = vmatpush1.bf16.msra.mxu0 %v1244
    %1765 = vmatprep.subr.bf16.mxu0 0
    %1766 = vmatpush1.bf16.msra.mxu0 %v1245
    %1767 = vmatprep.subr.bf16.mxu0 0
    %1768 = vmatpush1.bf16.msra.mxu0 %v1246
    %1769 = vmatprep.subr.bf16.mxu0 0
    %1770 = vmatpush1.bf16.msra.mxu0 %v1247
    %1771 = vmatprep.subr.bf16.mxu0 0
    %1772 = vmatpush1.bf16.msra.mxu0 %v1248
    %1773 = vmatprep.subr.bf16.mxu0 0
    %1774 = vmatpush1.bf16.msra.mxu0 %v1249
    %1775 = vmatprep.subr.bf16.mxu0 0
    %1776 = vmatpush1.bf16.msra.mxu0 %v1250
    %1777 = vmatprep.subr.bf16.mxu0 0
    %1778 = vmatpush1.bf16.msra.mxu0 %v1251
    %1779 = vmatprep.subr.bf16.mxu0 0
    %1780 = vmatpush1.bf16.msra.mxu0 %v1252
    %1781 = vmatprep.subr.bf16.mxu0 0
    %1782 = vmatpush1.bf16.msra.mxu0 %v1253
    %1783 = vmatprep.subr.bf16.mxu0 0
    %1784 = vmatpush1.bf16.msra.mxu0 %v1254
    %1785 = vmatprep.subr.bf16.mxu0 0
    %1786 = vmatpush1.bf16.msra.mxu0 %v1255
    %1787 = vmatprep.subr.bf16.mxu0 0
    %1788 = vmatpush1.bf16.msra.mxu0 %v1256
    %1789 = vmatprep.mubr.bf16.mxu0 %v610
    %1790 = vmatmul.mubr.bf16.gmra.mrb[0].mxu0 %v609
    %v1791 = vpop.f32.mrb[0].mxu0
    %v1792 = vadd.f32 %v1695, %v1791
    %v1793 = vpop.f32.mrb[0].mxu0
    %v1794 = vpop.f32.mrb[0].mxu0
    %v1795 = vadd.f32 %v1698, %v1794
    %v1796 = vpop.f32.mrb[0].mxu0
    %1797 = vmatprep.mubr.bf16.mxu0 %v622
    %1798 = vmatmul.mubr.bf16.gmra.mrb[0].mxu0 %v621
    %v1799 = vpop.f32.mrb[0].mxu0
    %v1800 = vadd.f32 %v1703, %v1799
    %v1801 = vpop.f32.mrb[0].mxu0
    %v1802 = vpop.f32.mrb[0].mxu0
    %v1803 = vadd.f32 %v1706, %v1802
    %v1804 = vpop.f32.mrb[0].mxu0
    %1805 = vmatprep.mubr.bf16.mxu0 %v634
    %1806 = vmatmul.mubr.bf16.gmra.mrb[0].mxu0 %v633
    %v1807 = vpop.f32.mrb[0].mxu0
    %v1808 = vadd.f32 %v1711, %v1807
    %v1809 = vpop.f32.mrb[0].mxu0
    %v1810 = vpop.f32.mrb[0].mxu0
    %v1811 = vadd.f32 %v1714, %v1810
    %v1812 = vpop.f32.mrb[0].mxu0
    %1813 = vmatprep.mubr.bf16.mxu0 %v646
    %1814 = vmatmul.mubr.bf16.gmra.mrb[0].mxu0 %v645
    %v1815 = vpop.f32.mrb[0].mxu0
    %v1816 = vadd.f32 %v1719, %v1815
    %v1817 = vpop.f32.mrb[0].mxu0
    %v1818 = vpop.f32.mrb[0].mxu0
    %v1819 = vadd.f32 %v1722, %v1818
    %v1820 = vpop.f32.mrb[0].mxu0
    %1821 = vmatprep.mubr.bf16.mxu0 %v658
    %1822 = vmatmul.mubr.bf16.gmra.mrb[0].mxu0 %v657
    %v1823 = vpop.f32.mrb[0].mxu0
    %v1824 = vadd.f32 %v1727, %v1823
    %v1825 = vpop.f32.mrb[0].mxu0
    %v1826 = vpop.f32.mrb[0].mxu0
    %v1827 = vadd.f32 %v1730, %v1826
    %v1828 = vpop.f32.mrb[0].mxu0
    %1829 = vmatprep.mubr.bf16.mxu0 %v670
    %1830 = vmatmul.mubr.bf16.gmra.mrb[0].mxu0 %v669
    %v1831 = vpop.f32.mrb[0].mxu0
    %v1832 = vadd.f32 %v1735, %v1831
    %v1833 = vpop.f32.mrb[0].mxu0
    %v1834 = vpop.f32.mrb[0].mxu0
    %v1835 = vadd.f32 %v1738, %v1834
    %v1836 = vpop.f32.mrb[0].mxu0
    %1837 = vmatprep.mubr.bf16.mxu0 %v682
    %1838 = vmatmul.mubr.bf16.gmra.mrb[0].mxu0 %v681
    %v1839 = vpop.f32.mrb[0].mxu0
    %v1840 = vadd.f32 %v1743, %v1839
    %v1841 = vpop.f32.mrb[0].mxu0
    %v1842 = vpop.f32.mrb[0].mxu0
    %v1843 = vadd.f32 %v1746, %v1842
    %v1844 = vpop.f32.mrb[0].mxu0
    %1845 = vmatprep.mubr.bf16.mxu0 %v694
    %1846 = vmatmul.mubr.bf16.gmra.mrb[0].mxu0 %v693
    %v1847 = vpop.f32.mrb[0].mxu0
    %v1848 = vadd.f32 %v1751, %v1847
    %v1849 = vpop.f32.mrb[0].mxu0
    %v1850 = vpop.f32.mrb[0].mxu0
    %v1851 = vadd.f32 %v1754, %v1850
    %v1852 = vpop.f32.mrb[0].mxu0
    %1853 = vdwg.mxu0
    %1854 = vmatprep.subr.bf16.mxu0 0
    %1855 = vmatpush1.bf16.msra.mxu0 %v1257
    %1856 = vmatprep.subr.bf16.mxu0 0
    %1857 = vmatpush1.bf16.msra.mxu0 %v1258
    %1858 = vmatprep.subr.bf16.mxu0 0
    %1859 = vmatpush1.bf16.msra.mxu0 %v1259
    %1860 = vmatprep.subr.bf16.mxu0 0
    %1861 = vmatpush1.bf16.msra.mxu0 %v1260
    %1862 = vmatprep.subr.bf16.mxu0 0
    %1863 = vmatpush1.bf16.msra.mxu0 %v1261
    %1864 = vmatprep.subr.bf16.mxu0 0
    %1865 = vmatpush1.bf16.msra.mxu0 %v1262
    %1866 = vmatprep.subr.bf16.mxu0 0
    %1867 = vmatpush1.bf16.msra.mxu0 %v1263
    %1868 = vmatprep.subr.bf16.mxu0 0
    %1869 = vmatpush1.bf16.msra.mxu0 %v1264
    %1870 = vmatprep.subr.bf16.mxu0 0
    %1871 = vmatpush1.bf16.msra.mxu0 %v1265
    %1872 = vmatprep.subr.bf16.mxu0 0
    %1873 = vmatpush1.bf16.msra.mxu0 %v1266
    %1874 = vmatprep.subr.bf16.mxu0 0
    %1875 = vmatpush1.bf16.msra.mxu0 %v1267
    %1876 = vmatprep.subr.bf16.mxu0 0
    %1877 = vmatpush1.bf16.msra.mxu0 %v1268
    %1878 = vmatprep.subr.bf16.mxu0 0
    %1879 = vmatpush1.bf16.msra.mxu0 %v1269
    %1880 = vmatprep.subr.bf16.mxu0 0
    %1881 = vmatpush1.bf16.msra.mxu0 %v1270
    %1882 = vmatprep.subr.bf16.mxu0 0
    %1883 = vmatpush1.bf16.msra.mxu0 %v1271
    %1884 = vmatprep.subr.bf16.mxu0 0
    %1885 = vmatpush1.bf16.msra.mxu0 %v1272
    %1886 = vmatprep.mubr.bf16.mxu0 %v612
    %1887 = vmatmul.mubr.bf16.gmra.mrb[0].mxu0 %v611
    %v1888 = vpop.f32.mrb[0].mxu0
    %v1889 = vadd.f32 %v1792, %v1888
    %v1890 = vpop.f32.mrb[0].mxu0
    %v1891 = vpop.f32.mrb[0].mxu0
    %v1892 = vadd.f32 %v1795, %v1891
    %v1893 = vpop.f32.mrb[0].mxu0
    %1894 = vmatprep.mubr.bf16.mxu0 %v624
    %1895 = vmatmul.mubr.bf16.gmra.mrb[0].mxu0 %v623
    %v1896 = vpop.f32.mrb[0].mxu0
    %v1897 = vadd.f32 %v1800, %v1896
    %v1898 = vpop.f32.mrb[0].mxu0
    %v1899 = vpop.f32.mrb[0].mxu0
    %v1900 = vadd.f32 %v1803, %v1899
    %v1901 = vpop.f32.mrb[0].mxu0
    %1902 = vmatprep.mubr.bf16.mxu0 %v636
    %1903 = vmatmul.mubr.bf16.gmra.mrb[0].mxu0 %v635
    %v1904 = vpop.f32.mrb[0].mxu0
    %v1905 = vadd.f32 %v1808, %v1904
    %v1906 = vpop.f32.mrb[0].mxu0
    %v1907 = vpop.f32.mrb[0].mxu0
    %v1908 = vadd.f32 %v1811, %v1907
    %v1909 = vpop.f32.mrb[0].mxu0
    %1910 = vmatprep.mubr.bf16.mxu0 %v648
    %1911 = vmatmul.mubr.bf16.gmra.mrb[0].mxu0 %v647
    %v1912 = vpop.f32.mrb[0].mxu0
    %v1913 = vadd.f32 %v1816, %v1912
    %v1914 = vpop.f32.mrb[0].mxu0
    %v1915 = vpop.f32.mrb[0].mxu0
    %v1916 = vadd.f32 %v1819, %v1915
    %v1917 = vpop.f32.mrb[0].mxu0
    %1918 = vmatprep.mubr.bf16.mxu0 %v660
    %1919 = vmatmul.mubr.bf16.gmra.mrb[0].mxu0 %v659
    %v1920 = vpop.f32.mrb[0].mxu0
    %v1921 = vadd.f32 %v1824, %v1920
    %v1922 = vpop.f32.mrb[0].mxu0
    %v1923 = vpop.f32.mrb[0].mxu0
    %v1924 = vadd.f32 %v1827, %v1923
    %v1925 = vpop.f32.mrb[0].mxu0
    %1926 = vmatprep.mubr.bf16.mxu0 %v672
    %1927 = vmatmul.mubr.bf16.gmra.mrb[0].mxu0 %v671
    %v1928 = vpop.f32.mrb[0].mxu0
    %v1929 = vadd.f32 %v1832, %v1928
    %v1930 = vpop.f32.mrb[0].mxu0
    %v1931 = vpop.f32.mrb[0].mxu0
    %v1932 = vadd.f32 %v1835, %v1931
    %v1933 = vpop.f32.mrb[0].mxu0
    %1934 = vmatprep.mubr.bf16.mxu0 %v684
    %1935 = vmatmul.mubr.bf16.gmra.mrb[0].mxu0 %v683
    %v1936 = vpop.f32.mrb[0].mxu0
    %v1937 = vadd.f32 %v1840, %v1936
    %v1938 = vpop.f32.mrb[0].mxu0
    %v1939 = vpop.f32.mrb[0].mxu0
    %v1940 = vadd.f32 %v1843, %v1939
    %v1941 = vpop.f32.mrb[0].mxu0
    %1942 = vmatprep.mubr.bf16.mxu0 %v696
    %1943 = vmatmul.mubr.bf16.gmra.mrb[0].mxu0 %v695
    %v1944 = vpop.f32.mrb[0].mxu0
    %v1945 = vadd.f32 %v1848, %v1944
    %v1946 = vpop.f32.mrb[0].mxu0
    %v1947 = vpop.f32.mrb[0].mxu0
    %v1948 = vadd.f32 %v1851, %v1947
    %v1949 = vpop.f32.mrb[0].mxu0
    %1950 = vdwg.mxu0
    %v1951 = vmax.f32 %v1889, 0.0
    %v1952 = vmax.f32 %v1892, 0.0
    %v1953 = vmax.f32 %v1897, 0.0
    %v1954 = vmax.f32 %v1900, 0.0
    %v1955 = vmax.f32 %v1905, 0.0
    %v1956 = vmax.f32 %v1908, 0.0
    %v1957 = vmax.f32 %v1913, 0.0
    %v1958 = vmax.f32 %v1916, 0.0
    %v1959 = vmax.f32 %v1921, 0.0
    %v1960 = vmax.f32 %v1924, 0.0
    %v1961 = vmax.f32 %v1929, 0.0
    %v1962 = vmax.f32 %v1932, 0.0
    %v1963 = vmax.f32 %v1937, 0.0
    %v1964 = vmax.f32 %v1940, 0.0
    %v1965 = vmax.f32 %v1945, 0.0
    %v1966 = vmax.f32 %v1948, 0.0
    %v1967 = vld [vmem:[#allocation2] sm:$0x3]
    %vm1968 = vcmask 523264
    %v1969 = vsel %vm1968, %v1951, 0.0
    %v1970 = vsel %vm1968, %v1952, 0.0
    %v1971 = vadd.f32 %v1969, %v1970
    %v1972 = vsel %vm1968, %v1953, 0.0
    %v1973 = vadd.f32 %v1971, %v1972
    %v1974 = vsel %vm1968, %v1954, 0.0
    %v1975 = vadd.f32 %v1973, %v1974
    %v1976 = vsel %vm1968, %v1955, 0.0
    %v1977 = vadd.f32 %v1975, %v1976
    %v1978 = vsel %vm1968, %v1956, 0.0
    %v1979 = vadd.f32 %v1977, %v1978
    %v1980 = vsel %vm1968, %v1957, 0.0
    %v1981 = vadd.f32 %v1979, %v1980
    %v1982 = vsel %vm1968, %v1958, 0.0
    %v1983 = vadd.f32 %v1981, %v1982
    %v1984 = vrot.slane %v1983, 4
    %v1985 = vadd.f32 %v1983, %v1984
    %v1986 = vrot.slane %v1985, 2
    %v1987 = vadd.f32 %v1985, %v1986
    %v1988 = vrot.slane %v1987, 1
    %v1989 = vadd.f32 %v1987, %v1988
    %v1990 = vsel %vm1968, %v1959, 0.0
    %v1991 = vsel %vm1968, %v1960, 0.0
    %v1992 = vadd.f32 %v1990, %v1991
    %v1993 = vsel %vm1968, %v1961, 0.0
    %v1994 = vadd.f32 %v1992, %v1993
    %v1995 = vsel %vm1968, %v1962, 0.0
    %v1996 = vadd.f32 %v1994, %v1995
    %v1997 = vsel %vm1968, %v1963, 0.0
    %v1998 = vadd.f32 %v1996, %v1997
    %v1999 = vsel %vm1968, %v1964, 0.0
    %v2000 = vadd.f32 %v1998, %v1999
    %v2001 = vsel %vm1968, %v1965, 0.0
    %v2002 = vadd.f32 %v2000, %v2001
    %v2003 = vsel %vm1968, %v1966, 0.0
    %v2004 = vadd.f32 %v2002, %v2003
    %v2005 = vrot.slane %v2004, 4
    %v2006 = vadd.f32 %v2004, %v2005
    %v2007 = vrot.slane %v2006, 2
    %v2008 = vadd.f32 %v2006, %v2007
    %v2009 = vrot.slane %v2008, 1
    %v2010 = vadd.f32 %v2008, %v2009
    %vm2013 = vcmask 1041409
    %v2014 = vsel %vm2013, %v2010, %v1989
    %v2016 = vadd.f32 %v1967, %v2014
    %vm2017 = vcmask 517120
    %2018 = vst.msk [vmem:[#allocation2] sm:$0x3] %vm2017, %v2016
    // Predicated region
    $region22: #{rsna24_forward.1} parent=1 // pred_check
      %p2019 = pneg %p19
    $region23: #{rsna24_forward.1} parent=1 // pred_check_branch
      %2021 = sbr.rel (%p2019) target = $region25
    $region24: #{rsna24_forward.1} parent=1 // pred_region
      %v2022 = vld [vmem:[#allocation2] sm:$0x3]
      %v2023 = vmul.f32 %v2022, 0.015625
      %v2024 = vld [vmem:[%s2] sm:$0xff]
      %v2025 = vld [vmem:[%s2 + $0x8] sm:$0xff]
      %v2026 = vld [vmem:[%s2 + $0x10] sm:$0xff]
      %v2027 = vld [vmem:[%s2 + $0x18] sm:$0xff]
      %v2028 = vld [vmem:[%s2 + $0x20] sm:$0xff]
      %v2029 = vld [vmem:[%s2 + $0x28] sm:$0xff]
      %v2030 = vld [vmem:[%s2 + $0x30] sm:$0xff]
      %v2031 = vld [vmem:[%s2 + $0x38] sm:$0xff]
      %v2032 = vld [vmem:[%s3] sm:$0x1]
      %v2034 = vlaneseq
      %v2035 = vshrl.u32 %v2034, 7
      %v2036 = vsub.s32 0, %v2035
      %v2037 = vrot.slane %v2032, %v2036
      %v2040 = vsel %vm1968, %v2023, 0
      %2042 = vmatprep.subr.mxu0 0.0
      %2043 = vmatpush1.msra.mxu0 %v2024
      %2044 = vmatprep.subr.mxu0 0.0
      %2045 = vmatpush1.msra.mxu0 %v2025
      %2046 = vmatprep.subr.mxu0 0.0
      %2047 = vmatpush1.msra.mxu0 %v2026
      %2048 = vmatprep.subr.mxu0 0.0
      %2049 = vmatpush1.msra.mxu0 %v2027
      %2050 = vmatprep.subr.mxu0 0.0
      %2051 = vmatpush1.msra.mxu0 %v2028
      %2052 = vmatprep.subr.mxu0 0.0
      %2053 = vmatpush1.msra.mxu0 %v2029
      %2054 = vmatprep.subr.mxu0 0.0
      %2055 = vmatpush1.msra.mxu0 %v2030
      %2056 = vmatprep.subr.mxu0 0.0
      %2057 = vmatpush1.msra.mxu0 %v2031
      %2058 = vmatprep.subr.mxu0 0.0
      %2059 = vmatpush1.msra.mxu0 0.0
      %2060 = vmatprep.subr.mxu0 0.0
      %2061 = vmatpush1.msra.mxu0 0.0
      %2062 = vmatprep.subr.mxu0 0.0
      %2063 = vmatpush1.msra.mxu0 0.0
      %2064 = vmatprep.subr.mxu0 0.0
      %2065 = vmatpush1.msra.mxu0 0.0
      %2066 = vmatprep.subr.mxu0 0.0
      %2067 = vmatpush1.msra.mxu0 0.0
      %2068 = vmatprep.subr.mxu0 0.0
      %2069 = vmatpush1.msra.mxu0 0.0
      %2070 = vmatprep.subr.mxu0 0.0
      %2071 = vmatpush1.msra.mxu0 0.0
      %2072 = vmatprep.subr.mxu0 0.0
      %2073 = vmatpush1.msra.mxu0 0.0
      %2074 = vmatprep.subr.mxu0 0.0
      %2075 = vmatpush1.msra.mxu0 0.0
      %2076 = vmatprep.subr.mxu0 0.0
      %2077 = vmatpush1.msra.mxu0 0.0
      %2078 = vmatprep.subr.mxu0 0.0
      %2079 = vmatpush1.msra.mxu0 0.0
      %2080 = vmatprep.subr.mxu0 0.0
      %2081 = vmatpush1.msra.mxu0 0.0
      %2082 = vmatprep.subr.mxu0 0.0
      %2083 = vmatpush1.msra.mxu0 0.0
      %2084 = vmatprep.subr.mxu0 0.0
      %2085 = vmatpush1.msra.mxu0 0.0
      %2086 = vmatprep.subr.mxu0 0.0
      %2087 = vmatpush1.msra.mxu0 0.0
      %2088 = vmatprep.subr.mxu0 0.0
      %2089 = vmatpush1.msra.mxu0 0.0
      %2090 = vmatprep.subr.mxu0 0.0
      %2091 = vmatpush1.msra.mxu0 0.0
      %2092 = vmatprep.subr.mxu0 0.0
      %2093 = vmatpush1.msra.mxu0 0.0
      %2094 = vmatprep.subr.mxu0 0.0
      %2095 = vmatpush1.msra.mxu0 0.0
      %2096 = vmatprep.subr.mxu0 0.0
      %2097 = vmatpush1.msra.mxu0 0.0
      %2098 = vmatprep.subr.mxu0 0.0
      %2099 = vmatpush1.msra.mxu0 0.0
      %2100 = vmatprep.subr.mxu0 0.0
      %2101 = vmatpush1.msra.mxu0 0.0
      %2102 = vmatprep.subr.mxu0 0.0
      %2103 = vmatpush1.msra.mxu0 0.0
      %2104 = vmatprep.subr.mxu0 0.0
      %2105 = vmatpush1.msra.mxu0 0.0
      %2106 = vmatprep.mubr.f32.mxu0 0.0
      %2107 = vmatmul.mubr.f32.gmra.mrb[0].mxu0 %v2040
      %v2108 = vpop.f32.mrb[0].mxu0
      %v2109 = vadd.f32 %v2037, %v2108
      %v2110 = vpop.f32.mrb[0].mxu0
      %2111 = vdwg.mxu0
      %2112 = vst [vmem:[#allocation3] sm:$0x3] %v2109
    $region25: #{rsna24_forward.1} parent=1 // pred_fallthru
      _
    // Predicated region
    $region26: #{rsna24_forward.1} parent=1 // pred_check
      _
    $region27: #{rsna24_forward.1} parent=1 // pred_check_branch
      %2114 = sbr.rel (0) target = $region29
    $region28: #{rsna24_forward.1} parent=1 // pred_region
      %s2116 = ssub.s32 32, 32
      %2117 = vsyncadd [#allocation4], %s2116
      %s2119 = sshll.u32 [#allocation3], 4
      %s2120 = int_to_ptr.vmem [resolvable:$true] %s2119
      %2122 = dma.vmem_to_hbm [thread:$0]  %s2120, 32, %s4, [#allocation4]
    $region29: #{rsna24_forward.1} parent=1 // pred_fallthru
      _
    // Predicated region
    $region30: #{rsna24_forward.1} parent=1 // pred_check
      _
    $region31: #{rsna24_forward.1} parent=1 // pred_check_branch
      %2124 = sbr.rel (0) target = $region33
    $region32: #{rsna24_forward.1} parent=1 // pred_region
      %2125 = dma.done [#allocation4], 32
    $region33: #{rsna24_forward.1} parent=1 // pred_fallthru
      _
    %2126 = vsyncpa [#allocation4], 1

</llo_original>
